<compile_context>
chip_gen: v5e
topology: v5e:2x2
jax: 0.10.0
libtpu: 0.0.40
codegen_flags: <defaults>
</compile_context>

<pallas_src>
import jax
import jax.numpy as jnp
import numpy as np
from jax import lax
from jax.experimental import pallas as pl
from jax.experimental.pallas import tpu as pltpu


# ----------------------------- Pallas kernel ------------------------------- #
def _encoder_gru_kernel(x_ref, lens_ref, wih_ref, whh_ref, bih_ref, bhh_ref,
                        out_ref, hid_ref, gi_ref):
    """Single-invocation GRU: hoisted input projection + in-kernel recurrence.

    x_ref   : (T*Bp, D)  all timesteps, batch padded to Bp (multiple of 8)
    lens_ref: (Bp, 1)    int32 sequence lengths (0 for padded batch rows)
    wih_ref : (D, 3H)    W_ih^T, gate order r|z|n along lanes
    whh_ref : (H, 3H)    W_hh^T
    bih/bhh : (1, 3H)
    out_ref : (T, Bp, H) padded outputs (lane-dense: H is a multiple of 128)
    hid_ref : (1, Bp, H) final hidden state
    gi_ref  : (T*Bp, 3H) VMEM scratch holding the hoisted input projection
    """
    T, Bp, H = out_ref.shape

    # ---- Phase 1: input projection for ALL timesteps in one MXU push ------ #
    #   (T*Bp, D) @ (D, 3H) -> (T*Bp, 3H), bias folded in.
    gi_ref[...] = (
        jnp.dot(x_ref[...], wih_ref[...], preferred_element_type=jnp.float32)
        + bih_ref[...])

    lens = lens_ref[...]                     # (Bp, 1) int32
    whh = whh_ref[...]                       # (H, 3H) loaded once, stays resident
    bhh = bhh_ref[...]                       # (1, 3H)

    # ---- Phase 2: sequential recurrence over time (fully unrolled) -------- #
    def step(t, h_prev):                     # h_prev: (Bp, H) f32
        base = pl.multiple_of(t * Bp, Bp)
        gi = gi_ref[pl.ds(base, Bp), :]      # (Bp, 3H) precomputed x-projection
        gh = jnp.dot(h_prev, whh, preferred_element_type=jnp.float32) + bhh
        r = jax.nn.sigmoid(gi[:, 0:H] + gh[:, 0:H])
        z = jax.nn.sigmoid(gi[:, H:2 * H] + gh[:, H:2 * H])
        n = jnp.tanh(gi[:, 2 * H:3 * H] + r * gh[:, 2 * H:3 * H])
        h_new = (1.0 - z) * n + z * h_prev

        valid = lens > t                     # (Bp, 1) bool, computed once, shared
        out_ref[t] = jnp.where(valid, h_new, 0.0)   # pad_packed_sequence zeros
        return jnp.where(valid, h_new, h_prev)      # freeze finished sequences

    h_last = lax.fori_loop(0, T, step,
                           jnp.zeros((Bp, H), jnp.float32), unroll=True)
    hid_ref[0] = h_last


# ------------------------------- Wrapper ------------------------------------ #
def encoder_forward(src, src_len, w_ih, w_hh, b_ih, b_hh):
    """src: (T, B, D) f32, src_len: (B,) int32 (descending, src_len[0] == T).

    Returns (outputs (T, B, H), hidden (1, B, H)) — same as the PyTorch module.
    """
    T, B, D = src.shape
    H = w_hh.shape[1]
    Bp = ((B + 7) // 8) * 8          # pad batch to a full sublane group (>= 8)

    # Pad batch; padded rows get length 0 -> state frozen at 0, outputs 0.
    src_p = jnp.pad(jnp.asarray(src, jnp.float32),
                    ((0, 0), (0, Bp - B), (0, 0)))
    lens_p = jnp.pad(jnp.asarray(src_len, jnp.int32), (0, Bp - B))

    x_flat = src_p.reshape(T * Bp, D)                    # all timesteps, one slab
    wih_t = jnp.asarray(w_ih, jnp.float32).T             # (D, 3H), gates r|z|n
    whh_t = jnp.asarray(w_hh, jnp.float32).T             # (H, 3H)
    bih = jnp.asarray(b_ih, jnp.float32).reshape(1, 3 * H)
    bhh = jnp.asarray(b_hh, jnp.float32).reshape(1, 3 * H)
    lens2d = lens_p.reshape(Bp, 1)

    outputs_p, hidden_p = pl.pallas_call(
        _encoder_gru_kernel,
        out_shape=(
            jax.ShapeDtypeStruct((T, Bp, H), jnp.float32),
            jax.ShapeDtypeStruct((1, Bp, H), jnp.float32),
        ),
        grid=(1,),                       # single invocation: whole problem in VMEM
        in_specs=[
            pl.BlockSpec((T * Bp, D), lambda i: (0, 0)),     # x (all steps)
            pl.BlockSpec((Bp, 1), lambda i: (0, 0)),         # lengths
            pl.BlockSpec((D, 3 * H), lambda i: (0, 0)),      # W_ih^T
            pl.BlockSpec((H, 3 * H), lambda i: (0, 0)),      # W_hh^T
            pl.BlockSpec((1, 3 * H), lambda i: (0, 0)),      # b_ih
            pl.BlockSpec((1, 3 * H), lambda i: (0, 0)),      # b_hh
        ],
        out_specs=(
            pl.BlockSpec((T, Bp, H), lambda i: (0, 0, 0)),   # outputs
            pl.BlockSpec((1, Bp, H), lambda i: (0, 0, 0)),   # hidden
        ),
        scratch_shapes=[pltpu.VMEM((T * Bp, 3 * H), jnp.float32)],  # hoisted gi
        compiler_params=pltpu.CompilerParams(
            dimension_semantics=("arbitrary",),
            vmem_limit_bytes=32 * 1024 * 1024,   # safe on v5e/v6e/v7x
        ),
    )(x_flat, lens2d, wih_t, whh_t, bih, bhh)

    return outputs_p[:, :B, :], hidden_p[:, :B, :]


# ------------------------- Pure-JAX reference (check) ----------------------- #
def encoder_reference(src, src_len, w_ih, w_hh, b_ih, b_hh):
    T, B, D = src.shape
    H = w_hh.shape[1]
    lens = jnp.asarray(src_len, jnp.int32)
    hp = lax.Precision.HIGHEST

    def cell(h_prev, inp):
        x, t = inp
        gi = jnp.dot(x, w_ih.T, precision=hp) + b_ih
        gh = jnp.dot(h_prev, w_hh.T, precision=hp) + b_hh
        r = jax.nn.sigmoid(gi[:, :H] + gh[:, :H])
        z = jax.nn.sigmoid(gi[:, H:2 * H] + gh[:, H:2 * H])
        n = jnp.tanh(gi[:, 2 * H:] + r * gh[:, 2 * H:])
        h_new = (1.0 - z) * n + z * h_prev
        valid = (lens > t)[:, None]
        h_next = jnp.where(valid, h_new, h_prev)
        out_t = jnp.where(valid, h_new, 0.0)
        return h_next, out_t

    h0 = jnp.zeros((B, H), jnp.float32)
    h_last, outs = lax.scan(cell, h0,
                            (jnp.asarray(src, jnp.float32), jnp.arange(T)))
    return outs, h_last[None]


# --------------------------------- Main -------------------------------------- #
if __name__ == "__main__":
    T, B, D, H = 8, 6, 64, 128   # seq len, batch, input_dim, hid_dim

    key = jax.random.PRNGKey(0)
    k_src, k_wih, k_whh, k_bih, k_bhh = jax.random.split(key, 5)

    src = jax.random.normal(k_src, (T, B, D), jnp.float32)
    # pack_padded_sequence requires descending lengths; max length == T.
    src_len = jnp.array([8, 7, 5, 4, 2, 1], jnp.int32)

    # PyTorch-style uniform(-1/sqrt(H), 1/sqrt(H)) init, deterministic.
    bound = 1.0 / np.sqrt(H)
    w_ih = jax.random.uniform(k_wih, (3 * H, D), jnp.float32, -bound, bound)
    w_hh = jax.random.uniform(k_whh, (3 * H, H), jnp.float32, -bound, bound)
    b_ih = jax.random.uniform(k_bih, (3 * H,), jnp.float32, -bound, bound)
    b_hh = jax.random.uniform(k_bhh, (3 * H,), jnp.float32, -bound, bound)

    outputs, hidden = encoder_forward(src, src_len, w_ih, w_hh, b_ih, b_hh)
    outputs = jax.block_until_ready(outputs)
    hidden = jax.block_until_ready(hidden)

    ref_out, ref_hid = encoder_reference(src, src_len, w_ih, w_hh, b_ih, b_hh)
    np.testing.assert_allclose(np.asarray(outputs), np.asarray(ref_out),
                               rtol=1e-5, atol=2e-5)
    np.testing.assert_allclose(np.asarray(hidden), np.asarray(ref_hid),
                               rtol=1e-5, atol=2e-5)

    print("KERNEL_OK")
</pallas_src>

<mosaic_0001>
module attributes {stable_mosaic.version = 11 : i64} {
  func.func @_encoder_gru_kernel(%arg0: i32, %arg1: memref<64x64xf32, #tpu.memory_space<vmem>>, %arg2: memref<8x1xi32, #tpu.memory_space<vmem>>, %arg3: memref<64x384xf32, #tpu.memory_space<vmem>>, %arg4: memref<128x384xf32, #tpu.memory_space<vmem>>, %arg5: memref<1x384xf32, #tpu.memory_space<vmem>>, %arg6: memref<1x384xf32, #tpu.memory_space<vmem>>, %arg7: memref<8x8x128xf32, #tpu.memory_space<vmem>>, %arg8: memref<1x8x128xf32, #tpu.memory_space<vmem>>, %arg9: memref<64x384xf32, #tpu.memory_space<vmem>>) attributes {dimension_semantics = [#tpu.dimension_semantics<arbitrary>], iteration_bounds = array<i64: 1>, scalar_prefetch = 0 : i64, scratch_operands = 1 : i64, tpu.core_type = #tpu.core_type<tc>, window_params = [{pipeline_mode = #tpu.pipeline_mode<synchronous>, transform_indices = @transform_0, window_bounds = array<i64: 64, 64>}, {pipeline_mode = #tpu.pipeline_mode<synchronous>, transform_indices = @transform_1, window_bounds = array<i64: 8, 1>}, {pipeline_mode = #tpu.pipeline_mode<synchronous>, transform_indices = @transform_2, window_bounds = array<i64: 64, 384>}, {pipeline_mode = #tpu.pipeline_mode<synchronous>, transform_indices = @transform_3, window_bounds = array<i64: 128, 384>}, {pipeline_mode = #tpu.pipeline_mode<synchronous>, transform_indices = @transform_4, window_bounds = array<i64: 1, 384>}, {pipeline_mode = #tpu.pipeline_mode<synchronous>, transform_indices = @transform_5, window_bounds = array<i64: 1, 384>}, {pipeline_mode = #tpu.pipeline_mode<synchronous>, transform_indices = @transform_6, window_bounds = array<i64: 8, 8, 128>}, {pipeline_mode = #tpu.pipeline_mode<synchronous>, transform_indices = @transform_7, window_bounds = array<i64: 1, 8, 128>}]} {
    %c0 = arith.constant 0 : index
    %c0_0 = arith.constant 0 : index
    %0 = vector.load %arg1[%c0, %c0_0] : memref<64x64xf32, #tpu.memory_space<vmem>>, vector<64x64xf32>
    %c0_1 = arith.constant 0 : index
    %c0_2 = arith.constant 0 : index
    %1 = vector.load %arg3[%c0_1, %c0_2] : memref<64x384xf32, #tpu.memory_space<vmem>>, vector<64x384xf32>
    %cst = arith.constant dense<0.000000e+00> : vector<64x384xf32>
    %2 = tpu.matmul %0, %1, %cst {dimension_numbers = #tpu.dot_dimension_numbers<[1], [0], [0], [1], [0, 0, 1, 1], [], []>} : vector<64x64xf32>, vector<64x384xf32>, vector<64x384xf32> -> vector<64x384xf32>
    %c0_3 = arith.constant 0 : index
    %c0_4 = arith.constant 0 : index
    %3 = vector.load %arg5[%c0_3, %c0_4] : memref<1x384xf32, #tpu.memory_space<vmem>>, vector<1x384xf32>
    %4 = vector.broadcast %3 : vector<1x384xf32> to vector<64x384xf32>
    %5 = arith.addf %2, %4 : vector<64x384xf32>
    %c0_5 = arith.constant 0 : index
    %c0_6 = arith.constant 0 : index
    %6 = vector.load %arg9[%c0_5, %c0_6] : memref<64x384xf32, #tpu.memory_space<vmem>>, vector<64x384xf32>
    tpu.vector_store %arg9[%c0_5, %c0_6], %5 {strides = array<i32>} : memref<64x384xf32, #tpu.memory_space<vmem>>, vector<64x384xf32>,
    %c0_7 = arith.constant 0 : index
    %c0_8 = arith.constant 0 : index
    %7 = vector.load %arg2[%c0_7, %c0_8] : memref<8x1xi32, #tpu.memory_space<vmem>>, vector<8x1xi32>
    %c0_9 = arith.constant 0 : index
    %c0_10 = arith.constant 0 : index
    %8 = vector.load %arg4[%c0_9, %c0_10] : memref<128x384xf32, #tpu.memory_space<vmem>>, vector<128x384xf32>
    %c0_11 = arith.constant 0 : index
    %c0_12 = arith.constant 0 : index
    %9 = vector.load %arg6[%c0_11, %c0_12] : memref<1x384xf32, #tpu.memory_space<vmem>>, vector<1x384xf32>
    %cst_13 = arith.constant 0.000000e+00 : f32
    %10 = vector.broadcast %cst_13 : f32 to vector<8x128xf32>
    %c0_i32 = arith.constant 0 : i32
    %c8_i32 = arith.constant 8 : i32
    %11 = arith.muli %c0_i32, %c8_i32 : i32
    %12 = tpu.assume_multiple %11, 8 : i32
    %13 = arith.index_cast %12 : i32 to index
    %c0_14 = arith.constant 0 : index
    %14 = vector.load %arg9[%13, %c0_14] : memref<64x384xf32, #tpu.memory_space<vmem>>, vector<8x384xf32>
    %cst_15 = arith.constant dense<0.000000e+00> : vector<8x384xf32>
    %15 = tpu.matmul %10, %8, %cst_15 {dimension_numbers = #tpu.dot_dimension_numbers<[1], [0], [0], [1], [0, 0, 1, 1], [], []>} : vector<8x128xf32>, vector<128x384xf32>, vector<8x384xf32> -> vector<8x384xf32>
    %16 = vector.broadcast %9 : vector<1x384xf32> to vector<8x384xf32>
    %17 = arith.addf %15, %16 : vector<8x384xf32>
    %18 = vector.extract_strided_slice %14 {offsets = [0, 0], sizes = [8, 128], strides = [1, 1]} : vector<8x384xf32> to vector<8x128xf32>
    %19 = vector.extract_strided_slice %17 {offsets = [0, 0], sizes = [8, 128], strides = [1, 1]} : vector<8x384xf32> to vector<8x128xf32>
    %20 = arith.addf %18, %19 : vector<8x128xf32>
    %21 = arith.negf %20 : vector<8x128xf32>
    %22 = math.exp %21 : vector<8x128xf32>
    %cst_16 = arith.constant 1.000000e+00 : f32
    %23 = vector.broadcast %cst_16 : f32 to vector<8x128xf32>
    %24 = arith.addf %23, %22 : vector<8x128xf32>
    %25 = arith.divf %23, %24 : vector<8x128xf32>
    %26 = vector.extract_strided_slice %14 {offsets = [0, 128], sizes = [8, 128], strides = [1, 1]} : vector<8x384xf32> to vector<8x128xf32>
    %27 = vector.extract_strided_slice %17 {offsets = [0, 128], sizes = [8, 128], strides = [1, 1]} : vector<8x384xf32> to vector<8x128xf32>
    %28 = arith.addf %26, %27 : vector<8x128xf32>
    %29 = arith.negf %28 : vector<8x128xf32>
    %30 = math.exp %29 : vector<8x128xf32>
    %cst_17 = arith.constant 1.000000e+00 : f32
    %31 = vector.broadcast %cst_17 : f32 to vector<8x128xf32>
    %32 = arith.addf %31, %30 : vector<8x128xf32>
    %33 = arith.divf %31, %32 : vector<8x128xf32>
    %34 = vector.extract_strided_slice %14 {offsets = [0, 256], sizes = [8, 128], strides = [1, 1]} : vector<8x384xf32> to vector<8x128xf32>
    %35 = vector.extract_strided_slice %17 {offsets = [0, 256], sizes = [8, 128], strides = [1, 1]} : vector<8x384xf32> to vector<8x128xf32>
    %36 = arith.mulf %25, %35 : vector<8x128xf32>
    %37 = arith.addf %34, %36 : vector<8x128xf32>
    %38 = math.tanh %37 : vector<8x128xf32>
    %cst_18 = arith.constant 1.000000e+00 : f32
    %39 = vector.broadcast %cst_18 : f32 to vector<8x128xf32>
    %40 = arith.subf %39, %33 : vector<8x128xf32>
    %41 = arith.mulf %40, %38 : vector<8x128xf32>
    %42 = arith.mulf %33, %10 : vector<8x128xf32>
    %43 = arith.addf %41, %42 : vector<8x128xf32>
    %44 = vector.broadcast %c0_i32 : i32 to vector<8x1xi32>
    %45 = arith.cmpi sgt, %7, %44 : vector<8x1xi32>
    %cst_19 = arith.constant 0.000000e+00 : f32
    %46 = vector.shape_cast %45 : vector<8x1xi1> to vector<8x1xi1>
    %47 = vector.broadcast %46 : vector<8x1xi1> to vector<8x128xi1>
    %48 = vector.broadcast %cst_19 : f32 to vector<8x128xf32>
    %49 = arith.select %47, %43, %48 : vector<8x128xi1>, vector<8x128xf32>
    %50 = arith.index_cast %c0_i32 : i32 to index
    %c0_20 = arith.constant 0 : index
    %c0_21 = arith.constant 0 : index
    %51 = vector.load %arg7[%50, %c0_20, %c0_21] : memref<8x8x128xf32, #tpu.memory_space<vmem>>, vector<1x8x128xf32>
    %52 = vector.shape_cast %51 : vector<1x8x128xf32> to vector<8x128xf32>
    %53 = vector.shape_cast %49 : vector<8x128xf32> to vector<1x8x128xf32>
    tpu.vector_store %arg7[%50, %c0_20, %c0_21], %53 {strides = array<i32>} : memref<8x8x128xf32, #tpu.memory_space<vmem>>, vector<1x8x128xf32>,
    %54 = vector.shape_cast %45 : vector<8x1xi1> to vector<8x1xi1>
    %55 = vector.broadcast %54 : vector<8x1xi1> to vector<8x128xi1>
    %56 = arith.select %55, %43, %10 : vector<8x128xi1>, vector<8x128xf32>
    %c1_i32 = arith.constant 1 : i32
    %c8_i32_22 = arith.constant 8 : i32
    %57 = arith.muli %c1_i32, %c8_i32_22 : i32
    %58 = tpu.assume_multiple %57, 8 : i32
    %59 = arith.index_cast %58 : i32 to index
    %c0_23 = arith.constant 0 : index
    %60 = vector.load %arg9[%59, %c0_23] : memref<64x384xf32, #tpu.memory_space<vmem>>, vector<8x384xf32>
    %cst_24 = arith.constant dense<0.000000e+00> : vector<8x384xf32>
    %61 = tpu.matmul %56, %8, %cst_24 {dimension_numbers = #tpu.dot_dimension_numbers<[1], [0], [0], [1], [0, 0, 1, 1], [], []>} : vector<8x128xf32>, vector<128x384xf32>, vector<8x384xf32> -> vector<8x384xf32>
    %62 = vector.broadcast %9 : vector<1x384xf32> to vector<8x384xf32>
    %63 = arith.addf %61, %62 : vector<8x384xf32>
    %64 = vector.extract_strided_slice %60 {offsets = [0, 0], sizes = [8, 128], strides = [1, 1]} : vector<8x384xf32> to vector<8x128xf32>
    %65 = vector.extract_strided_slice %63 {offsets = [0, 0], sizes = [8, 128], strides = [1, 1]} : vector<8x384xf32> to vector<8x128xf32>
    %66 = arith.addf %64, %65 : vector<8x128xf32>
    %67 = arith.negf %66 : vector<8x128xf32>
    %68 = math.exp %67 : vector<8x128xf32>
    %cst_25 = arith.constant 1.000000e+00 : f32
    %69 = vector.broadcast %cst_25 : f32 to vector<8x128xf32>
    %70 = arith.addf %69, %68 : vector<8x128xf32>
    %71 = arith.divf %69, %70 : vector<8x128xf32>
    %72 = vector.extract_strided_slice %60 {offsets = [0, 128], sizes = [8, 128], strides = [1, 1]} : vector<8x384xf32> to vector<8x128xf32>
    %73 = vector.extract_strided_slice %63 {offsets = [0, 128], sizes = [8, 128], strides = [1, 1]} : vector<8x384xf32> to vector<8x128xf32>
    %74 = arith.addf %72, %73 : vector<8x128xf32>
    %75 = arith.negf %74 : vector<8x128xf32>
    %76 = math.exp %75 : vector<8x128xf32>
    %cst_26 = arith.constant 1.000000e+00 : f32
    %77 = vector.broadcast %cst_26 : f32 to vector<8x128xf32>
    %78 = arith.addf %77, %76 : vector<8x128xf32>
    %79 = arith.divf %77, %78 : vector<8x128xf32>
    %80 = vector.extract_strided_slice %60 {offsets = [0, 256], sizes = [8, 128], strides = [1, 1]} : vector<8x384xf32> to vector<8x128xf32>
    %81 = vector.extract_strided_slice %63 {offsets = [0, 256], sizes = [8, 128], strides = [1, 1]} : vector<8x384xf32> to vector<8x128xf32>
    %82 = arith.mulf %71, %81 : vector<8x128xf32>
    %83 = arith.addf %80, %82 : vector<8x128xf32>
    %84 = math.tanh %83 : vector<8x128xf32>
    %cst_27 = arith.constant 1.000000e+00 : f32
    %85 = vector.broadcast %cst_27 : f32 to vector<8x128xf32>
    %86 = arith.subf %85, %79 : vector<8x128xf32>
    %87 = arith.mulf %86, %84 : vector<8x128xf32>
    %88 = arith.mulf %79, %56 : vector<8x128xf32>
    %89 = arith.addf %87, %88 : vector<8x128xf32>
    %90 = vector.broadcast %c1_i32 : i32 to vector<8x1xi32>
    %91 = arith.cmpi sgt, %7, %90 : vector<8x1xi32>
    %cst_28 = arith.constant 0.000000e+00 : f32
    %92 = vector.shape_cast %91 : vector<8x1xi1> to vector<8x1xi1>
    %93 = vector.broadcast %92 : vector<8x1xi1> to vector<8x128xi1>
    %94 = vector.broadcast %cst_28 : f32 to vector<8x128xf32>
    %95 = arith.select %93, %89, %94 : vector<8x128xi1>, vector<8x128xf32>
    %96 = arith.index_cast %c1_i32 : i32 to index
    %c0_29 = arith.constant 0 : index
    %c0_30 = arith.constant 0 : index
    %97 = vector.load %arg7[%96, %c0_29, %c0_30] : memref<8x8x128xf32, #tpu.memory_space<vmem>>, vector<1x8x128xf32>
    %98 = vector.shape_cast %97 : vector<1x8x128xf32> to vector<8x128xf32>
    %99 = vector.shape_cast %95 : vector<8x128xf32> to vector<1x8x128xf32>
    tpu.vector_store %arg7[%96, %c0_29, %c0_30], %99 {strides = array<i32>} : memref<8x8x128xf32, #tpu.memory_space<vmem>>, vector<1x8x128xf32>,
    %100 = vector.shape_cast %91 : vector<8x1xi1> to vector<8x1xi1>
    %101 = vector.broadcast %100 : vector<8x1xi1> to vector<8x128xi1>
    %102 = arith.select %101, %89, %56 : vector<8x128xi1>, vector<8x128xf32>
    %c2_i32 = arith.constant 2 : i32
    %c8_i32_31 = arith.constant 8 : i32
    %103 = arith.muli %c2_i32, %c8_i32_31 : i32
    %104 = tpu.assume_multiple %103, 8 : i32
    %105 = arith.index_cast %104 : i32 to index
    %c0_32 = arith.constant 0 : index
    %106 = vector.load %arg9[%105, %c0_32] : memref<64x384xf32, #tpu.memory_space<vmem>>, vector<8x384xf32>
    %cst_33 = arith.constant dense<0.000000e+00> : vector<8x384xf32>
    %107 = tpu.matmul %102, %8, %cst_33 {dimension_numbers = #tpu.dot_dimension_numbers<[1], [0], [0], [1], [0, 0, 1, 1], [], []>} : vector<8x128xf32>, vector<128x384xf32>, vector<8x384xf32> -> vector<8x384xf32>
    %108 = vector.broadcast %9 : vector<1x384xf32> to vector<8x384xf32>
    %109 = arith.addf %107, %108 : vector<8x384xf32>
    %110 = vector.extract_strided_slice %106 {offsets = [0, 0], sizes = [8, 128], strides = [1, 1]} : vector<8x384xf32> to vector<8x128xf32>
    %111 = vector.extract_strided_slice %109 {offsets = [0, 0], sizes = [8, 128], strides = [1, 1]} : vector<8x384xf32> to vector<8x128xf32>
    %112 = arith.addf %110, %111 : vector<8x128xf32>
    %113 = arith.negf %112 : vector<8x128xf32>
    %114 = math.exp %113 : vector<8x128xf32>
    %cst_34 = arith.constant 1.000000e+00 : f32
    %115 = vector.broadcast %cst_34 : f32 to vector<8x128xf32>
    %116 = arith.addf %115, %114 : vector<8x128xf32>
    %117 = arith.divf %115, %116 : vector<8x128xf32>
    %118 = vector.extract_strided_slice %106 {offsets = [0, 128], sizes = [8, 128], strides = [1, 1]} : vector<8x384xf32> to vector<8x128xf32>
    %119 = vector.extract_strided_slice %109 {offsets = [0, 128], sizes = [8, 128], strides = [1, 1]} : vector<8x384xf32> to vector<8x128xf32>
    %120 = arith.addf %118, %119 : vector<8x128xf32>
    %121 = arith.negf %120 : vector<8x128xf32>
    %122 = math.exp %121 : vector<8x128xf32>
    %cst_35 = arith.constant 1.000000e+00 : f32
    %123 = vector.broadcast %cst_35 : f32 to vector<8x128xf32>
    %124 = arith.addf %123, %122 : vector<8x128xf32>
    %125 = arith.divf %123, %124 : vector<8x128xf32>
    %126 = vector.extract_strided_slice %106 {offsets = [0, 256], sizes = [8, 128], strides = [1, 1]} : vector<8x384xf32> to vector<8x128xf32>
    %127 = vector.extract_strided_slice %109 {offsets = [0, 256], sizes = [8, 128], strides = [1, 1]} : vector<8x384xf32> to vector<8x128xf32>
    %128 = arith.mulf %117, %127 : vector<8x128xf32>
    %129 = arith.addf %126, %128 : vector<8x128xf32>
    %130 = math.tanh %129 : vector<8x128xf32>
    %cst_36 = arith.constant 1.000000e+00 : f32
    %131 = vector.broadcast %cst_36 : f32 to vector<8x128xf32>
    %132 = arith.subf %131, %125 : vector<8x128xf32>
    %133 = arith.mulf %132, %130 : vector<8x128xf32>
    %134 = arith.mulf %125, %102 : vector<8x128xf32>
    %135 = arith.addf %133, %134 : vector<8x128xf32>
    %136 = vector.broadcast %c2_i32 : i32 to vector<8x1xi32>
    %137 = arith.cmpi sgt, %7, %136 : vector<8x1xi32>
    %cst_37 = arith.constant 0.000000e+00 : f32
    %138 = vector.shape_cast %137 : vector<8x1xi1> to vector<8x1xi1>
    %139 = vector.broadcast %138 : vector<8x1xi1> to vector<8x128xi1>
    %140 = vector.broadcast %cst_37 : f32 to vector<8x128xf32>
    %141 = arith.select %139, %135, %140 : vector<8x128xi1>, vector<8x128xf32>
    %142 = arith.index_cast %c2_i32 : i32 to index
    %c0_38 = arith.constant 0 : index
    %c0_39 = arith.constant 0 : index
    %143 = vector.load %arg7[%142, %c0_38, %c0_39] : memref<8x8x128xf32, #tpu.memory_space<vmem>>, vector<1x8x128xf32>
    %144 = vector.shape_cast %143 : vector<1x8x128xf32> to vector<8x128xf32>
    %145 = vector.shape_cast %141 : vector<8x128xf32> to vector<1x8x128xf32>
    tpu.vector_store %arg7[%142, %c0_38, %c0_39], %145 {strides = array<i32>} : memref<8x8x128xf32, #tpu.memory_space<vmem>>, vector<1x8x128xf32>,
    %146 = vector.shape_cast %137 : vector<8x1xi1> to vector<8x1xi1>
    %147 = vector.broadcast %146 : vector<8x1xi1> to vector<8x128xi1>
    %148 = arith.select %147, %135, %102 : vector<8x128xi1>, vector<8x128xf32>
    %c3_i32 = arith.constant 3 : i32
    %c8_i32_40 = arith.constant 8 : i32
    %149 = arith.muli %c3_i32, %c8_i32_40 : i32
    %150 = tpu.assume_multiple %149, 8 : i32
    %151 = arith.index_cast %150 : i32 to index
    %c0_41 = arith.constant 0 : index
    %152 = vector.load %arg9[%151, %c0_41] : memref<64x384xf32, #tpu.memory_space<vmem>>, vector<8x384xf32>
    %cst_42 = arith.constant dense<0.000000e+00> : vector<8x384xf32>
    %153 = tpu.matmul %148, %8, %cst_42 {dimension_numbers = #tpu.dot_dimension_numbers<[1], [0], [0], [1], [0, 0, 1, 1], [], []>} : vector<8x128xf32>, vector<128x384xf32>, vector<8x384xf32> -> vector<8x384xf32>
    %154 = vector.broadcast %9 : vector<1x384xf32> to vector<8x384xf32>
    %155 = arith.addf %153, %154 : vector<8x384xf32>
    %156 = vector.extract_strided_slice %152 {offsets = [0, 0], sizes = [8, 128], strides = [1, 1]} : vector<8x384xf32> to vector<8x128xf32>
    %157 = vector.extract_strided_slice %155 {offsets = [0, 0], sizes = [8, 128], strides = [1, 1]} : vector<8x384xf32> to vector<8x128xf32>
    %158 = arith.addf %156, %157 : vector<8x128xf32>
    %159 = arith.negf %158 : vector<8x128xf32>
    %160 = math.exp %159 : vector<8x128xf32>
    %cst_43 = arith.constant 1.000000e+00 : f32
    %161 = vector.broadcast %cst_43 : f32 to vector<8x128xf32>
    %162 = arith.addf %161, %160 : vector<8x128xf32>
    %163 = arith.divf %161, %162 : vector<8x128xf32>
    %164 = vector.extract_strided_slice %152 {offsets = [0, 128], sizes = [8, 128], strides = [1, 1]} : vector<8x384xf32> to vector<8x128xf32>
    %165 = vector.extract_strided_slice %155 {offsets = [0, 128], sizes = [8, 128], strides = [1, 1]} : vector<8x384xf32> to vector<8x128xf32>
    %166 = arith.addf %164, %165 : vector<8x128xf32>
    %167 = arith.negf %166 : vector<8x128xf32>
    %168 = math.exp %167 : vector<8x128xf32>
    %cst_44 = arith.constant 1.000000e+00 : f32
    %169 = vector.broadcast %cst_44 : f32 to vector<8x128xf32>
    %170 = arith.addf %169, %168 : vector<8x128xf32>
    %171 = arith.divf %169, %170 : vector<8x128xf32>
    %172 = vector.extract_strided_slice %152 {offsets = [0, 256], sizes = [8, 128], strides = [1, 1]} : vector<8x384xf32> to vector<8x128xf32>
    %173 = vector.extract_strided_slice %155 {offsets = [0, 256], sizes = [8, 128], strides = [1, 1]} : vector<8x384xf32> to vector<8x128xf32>
    %174 = arith.mulf %163, %173 : vector<8x128xf32>
    %175 = arith.addf %172, %174 : vector<8x128xf32>
    %176 = math.tanh %175 : vector<8x128xf32>
    %cst_45 = arith.constant 1.000000e+00 : f32
    %177 = vector.broadcast %cst_45 : f32 to vector<8x128xf32>
    %178 = arith.subf %177, %171 : vector<8x128xf32>
    %179 = arith.mulf %178, %176 : vector<8x128xf32>
    %180 = arith.mulf %171, %148 : vector<8x128xf32>
    %181 = arith.addf %179, %180 : vector<8x128xf32>
    %182 = vector.broadcast %c3_i32 : i32 to vector<8x1xi32>
    %183 = arith.cmpi sgt, %7, %182 : vector<8x1xi32>
    %cst_46 = arith.constant 0.000000e+00 : f32
    %184 = vector.shape_cast %183 : vector<8x1xi1> to vector<8x1xi1>
    %185 = vector.broadcast %184 : vector<8x1xi1> to vector<8x128xi1>
    %186 = vector.broadcast %cst_46 : f32 to vector<8x128xf32>
    %187 = arith.select %185, %181, %186 : vector<8x128xi1>, vector<8x128xf32>
    %188 = arith.index_cast %c3_i32 : i32 to index
    %c0_47 = arith.constant 0 : index
    %c0_48 = arith.constant 0 : index
    %189 = vector.load %arg7[%188, %c0_47, %c0_48] : memref<8x8x128xf32, #tpu.memory_space<vmem>>, vector<1x8x128xf32>
    %190 = vector.shape_cast %189 : vector<1x8x128xf32> to vector<8x128xf32>
    %191 = vector.shape_cast %187 : vector<8x128xf32> to vector<1x8x128xf32>
    tpu.vector_store %arg7[%188, %c0_47, %c0_48], %191 {strides = array<i32>} : memref<8x8x128xf32, #tpu.memory_space<vmem>>, vector<1x8x128xf32>,
    %192 = vector.shape_cast %183 : vector<8x1xi1> to vector<8x1xi1>
    %193 = vector.broadcast %192 : vector<8x1xi1> to vector<8x128xi1>
    %194 = arith.select %193, %181, %148 : vector<8x128xi1>, vector<8x128xf32>
    %c4_i32 = arith.constant 4 : i32
    %c8_i32_49 = arith.constant 8 : i32
    %195 = arith.muli %c4_i32, %c8_i32_49 : i32
    %196 = tpu.assume_multiple %195, 8 : i32
    %197 = arith.index_cast %196 : i32 to index
    %c0_50 = arith.constant 0 : index
    %198 = vector.load %arg9[%197, %c0_50] : memref<64x384xf32, #tpu.memory_space<vmem>>, vector<8x384xf32>
    %cst_51 = arith.constant dense<0.000000e+00> : vector<8x384xf32>
    %199 = tpu.matmul %194, %8, %cst_51 {dimension_numbers = #tpu.dot_dimension_numbers<[1], [0], [0], [1], [0, 0, 1, 1], [], []>} : vector<8x128xf32>, vector<128x384xf32>, vector<8x384xf32> -> vector<8x384xf32>
    %200 = vector.broadcast %9 : vector<1x384xf32> to vector<8x384xf32>
    %201 = arith.addf %199, %200 : vector<8x384xf32>
    %202 = vector.extract_strided_slice %198 {offsets = [0, 0], sizes = [8, 128], strides = [1, 1]} : vector<8x384xf32> to vector<8x128xf32>
    %203 = vector.extract_strided_slice %201 {offsets = [0, 0], sizes = [8, 128], strides = [1, 1]} : vector<8x384xf32> to vector<8x128xf32>
    %204 = arith.addf %202, %203 : vector<8x128xf32>
    %205 = arith.negf %204 : vector<8x128xf32>
    %206 = math.exp %205 : vector<8x128xf32>
    %cst_52 = arith.constant 1.000000e+00 : f32
    %207 = vector.broadcast %cst_52 : f32 to vector<8x128xf32>
    %208 = arith.addf %207, %206 : vector<8x128xf32>
    %209 = arith.divf %207, %208 : vector<8x128xf32>
    %210 = vector.extract_strided_slice %198 {offsets = [0, 128], sizes = [8, 128], strides = [1, 1]} : vector<8x384xf32> to vector<8x128xf32>
    %211 = vector.extract_strided_slice %201 {offsets = [0, 128], sizes = [8, 128], strides = [1, 1]} : vector<8x384xf32> to vector<8x128xf32>
    %212 = arith.addf %210, %211 : vector<8x128xf32>
    %213 = arith.negf %212 : vector<8x128xf32>
    %214 = math.exp %213 : vector<8x128xf32>
    %cst_53 = arith.constant 1.000000e+00 : f32
    %215 = vector.broadcast %cst_53 : f32 to vector<8x128xf32>
    %216 = arith.addf %215, %214 : vector<8x128xf32>
    %217 = arith.divf %215, %216 : vector<8x128xf32>
    %218 = vector.extract_strided_slice %198 {offsets = [0, 256], sizes = [8, 128], strides = [1, 1]} : vector<8x384xf32> to vector<8x128xf32>
    %219 = vector.extract_strided_slice %201 {offsets = [0, 256], sizes = [8, 128], strides = [1, 1]} : vector<8x384xf32> to vector<8x128xf32>
    %220 = arith.mulf %209, %219 : vector<8x128xf32>
    %221 = arith.addf %218, %220 : vector<8x128xf32>
    %222 = math.tanh %221 : vector<8x128xf32>
    %cst_54 = arith.constant 1.000000e+00 : f32
    %223 = vector.broadcast %cst_54 : f32 to vector<8x128xf32>
    %224 = arith.subf %223, %217 : vector<8x128xf32>
    %225 = arith.mulf %224, %222 : vector<8x128xf32>
    %226 = arith.mulf %217, %194 : vector<8x128xf32>
    %227 = arith.addf %225, %226 : vector<8x128xf32>
    %228 = vector.broadcast %c4_i32 : i32 to vector<8x1xi32>
    %229 = arith.cmpi sgt, %7, %228 : vector<8x1xi32>
    %cst_55 = arith.constant 0.000000e+00 : f32
    %230 = vector.shape_cast %229 : vector<8x1xi1> to vector<8x1xi1>
    %231 = vector.broadcast %230 : vector<8x1xi1> to vector<8x128xi1>
    %232 = vector.broadcast %cst_55 : f32 to vector<8x128xf32>
    %233 = arith.select %231, %227, %232 : vector<8x128xi1>, vector<8x128xf32>
    %234 = arith.index_cast %c4_i32 : i32 to index
    %c0_56 = arith.constant 0 : index
    %c0_57 = arith.constant 0 : index
    %235 = vector.load %arg7[%234, %c0_56, %c0_57] : memref<8x8x128xf32, #tpu.memory_space<vmem>>, vector<1x8x128xf32>
    %236 = vector.shape_cast %235 : vector<1x8x128xf32> to vector<8x128xf32>
    %237 = vector.shape_cast %233 : vector<8x128xf32> to vector<1x8x128xf32>
    tpu.vector_store %arg7[%234, %c0_56, %c0_57], %237 {strides = array<i32>} : memref<8x8x128xf32, #tpu.memory_space<vmem>>, vector<1x8x128xf32>,
    %238 = vector.shape_cast %229 : vector<8x1xi1> to vector<8x1xi1>
    %239 = vector.broadcast %238 : vector<8x1xi1> to vector<8x128xi1>
    %240 = arith.select %239, %227, %194 : vector<8x128xi1>, vector<8x128xf32>
    %c5_i32 = arith.constant 5 : i32
    %c8_i32_58 = arith.constant 8 : i32
    %241 = arith.muli %c5_i32, %c8_i32_58 : i32
    %242 = tpu.assume_multiple %241, 8 : i32
    %243 = arith.index_cast %242 : i32 to index
    %c0_59 = arith.constant 0 : index
    %244 = vector.load %arg9[%243, %c0_59] : memref<64x384xf32, #tpu.memory_space<vmem>>, vector<8x384xf32>
    %cst_60 = arith.constant dense<0.000000e+00> : vector<8x384xf32>
    %245 = tpu.matmul %240, %8, %cst_60 {dimension_numbers = #tpu.dot_dimension_numbers<[1], [0], [0], [1], [0, 0, 1, 1], [], []>} : vector<8x128xf32>, vector<128x384xf32>, vector<8x384xf32> -> vector<8x384xf32>
    %246 = vector.broadcast %9 : vector<1x384xf32> to vector<8x384xf32>
    %247 = arith.addf %245, %246 : vector<8x384xf32>
    %248 = vector.extract_strided_slice %244 {offsets = [0, 0], sizes = [8, 128], strides = [1, 1]} : vector<8x384xf32> to vector<8x128xf32>
    %249 = vector.extract_strided_slice %247 {offsets = [0, 0], sizes = [8, 128], strides = [1, 1]} : vector<8x384xf32> to vector<8x128xf32>
    %250 = arith.addf %248, %249 : vector<8x128xf32>
    %251 = arith.negf %250 : vector<8x128xf32>
    %252 = math.exp %251 : vector<8x128xf32>
    %cst_61 = arith.constant 1.000000e+00 : f32
    %253 = vector.broadcast %cst_61 : f32 to vector<8x128xf32>
    %254 = arith.addf %253, %252 : vector<8x128xf32>
    %255 = arith.divf %253, %254 : vector<8x128xf32>
    %256 = vector.extract_strided_slice %244 {offsets = [0, 128], sizes = [8, 128], strides = [1, 1]} : vector<8x384xf32> to vector<8x128xf32>
    %257 = vector.extract_strided_slice %247 {offsets = [0, 128], sizes = [8, 128], strides = [1, 1]} : vector<8x384xf32> to vector<8x128xf32>
    %258 = arith.addf %256, %257 : vector<8x128xf32>
    %259 = arith.negf %258 : vector<8x128xf32>
    %260 = math.exp %259 : vector<8x128xf32>
    %cst_62 = arith.constant 1.000000e+00 : f32
    %261 = vector.broadcast %cst_62 : f32 to vector<8x128xf32>
    %262 = arith.addf %261, %260 : vector<8x128xf32>
    %263 = arith.divf %261, %262 : vector<8x128xf32>
    %264 = vector.extract_strided_slice %244 {offsets = [0, 256], sizes = [8, 128], strides = [1, 1]} : vector<8x384xf32> to vector<8x128xf32>
    %265 = vector.extract_strided_slice %247 {offsets = [0, 256], sizes = [8, 128], strides = [1, 1]} : vector<8x384xf32> to vector<8x128xf32>
    %266 = arith.mulf %255, %265 : vector<8x128xf32>
    %267 = arith.addf %264, %266 : vector<8x128xf32>
    %268 = math.tanh %267 : vector<8x128xf32>
    %cst_63 = arith.constant 1.000000e+00 : f32
    %269 = vector.broadcast %cst_63 : f32 to vector<8x128xf32>
    %270 = arith.subf %269, %263 : vector<8x128xf32>
    %271 = arith.mulf %270, %268 : vector<8x128xf32>
    %272 = arith.mulf %263, %240 : vector<8x128xf32>
    %273 = arith.addf %271, %272 : vector<8x128xf32>
    %274 = vector.broadcast %c5_i32 : i32 to vector<8x1xi32>
    %275 = arith.cmpi sgt, %7, %274 : vector<8x1xi32>
    %cst_64 = arith.constant 0.000000e+00 : f32
    %276 = vector.shape_cast %275 : vector<8x1xi1> to vector<8x1xi1>
    %277 = vector.broadcast %276 : vector<8x1xi1> to vector<8x128xi1>
    %278 = vector.broadcast %cst_64 : f32 to vector<8x128xf32>
    %279 = arith.select %277, %273, %278 : vector<8x128xi1>, vector<8x128xf32>
    %280 = arith.index_cast %c5_i32 : i32 to index
    %c0_65 = arith.constant 0 : index
    %c0_66 = arith.constant 0 : index
    %281 = vector.load %arg7[%280, %c0_65, %c0_66] : memref<8x8x128xf32, #tpu.memory_space<vmem>>, vector<1x8x128xf32>
    %282 = vector.shape_cast %281 : vector<1x8x128xf32> to vector<8x128xf32>
    %283 = vector.shape_cast %279 : vector<8x128xf32> to vector<1x8x128xf32>
    tpu.vector_store %arg7[%280, %c0_65, %c0_66], %283 {strides = array<i32>} : memref<8x8x128xf32, #tpu.memory_space<vmem>>, vector<1x8x128xf32>,
    %284 = vector.shape_cast %275 : vector<8x1xi1> to vector<8x1xi1>
    %285 = vector.broadcast %284 : vector<8x1xi1> to vector<8x128xi1>
    %286 = arith.select %285, %273, %240 : vector<8x128xi1>, vector<8x128xf32>
    %c6_i32 = arith.constant 6 : i32
    %c8_i32_67 = arith.constant 8 : i32
    %287 = arith.muli %c6_i32, %c8_i32_67 : i32
    %288 = tpu.assume_multiple %287, 8 : i32
    %289 = arith.index_cast %288 : i32 to index
    %c0_68 = arith.constant 0 : index
    %290 = vector.load %arg9[%289, %c0_68] : memref<64x384xf32, #tpu.memory_space<vmem>>, vector<8x384xf32>
    %cst_69 = arith.constant dense<0.000000e+00> : vector<8x384xf32>
    %291 = tpu.matmul %286, %8, %cst_69 {dimension_numbers = #tpu.dot_dimension_numbers<[1], [0], [0], [1], [0, 0, 1, 1], [], []>} : vector<8x128xf32>, vector<128x384xf32>, vector<8x384xf32> -> vector<8x384xf32>
    %292 = vector.broadcast %9 : vector<1x384xf32> to vector<8x384xf32>
    %293 = arith.addf %291, %292 : vector<8x384xf32>
    %294 = vector.extract_strided_slice %290 {offsets = [0, 0], sizes = [8, 128], strides = [1, 1]} : vector<8x384xf32> to vector<8x128xf32>
    %295 = vector.extract_strided_slice %293 {offsets = [0, 0], sizes = [8, 128], strides = [1, 1]} : vector<8x384xf32> to vector<8x128xf32>
    %296 = arith.addf %294, %295 : vector<8x128xf32>
    %297 = arith.negf %296 : vector<8x128xf32>
    %298 = math.exp %297 : vector<8x128xf32>
    %cst_70 = arith.constant 1.000000e+00 : f32
    %299 = vector.broadcast %cst_70 : f32 to vector<8x128xf32>
    %300 = arith.addf %299, %298 : vector<8x128xf32>
    %301 = arith.divf %299, %300 : vector<8x128xf32>
    %302 = vector.extract_strided_slice %290 {offsets = [0, 128], sizes = [8, 128], strides = [1, 1]} : vector<8x384xf32> to vector<8x128xf32>
    %303 = vector.extract_strided_slice %293 {offsets = [0, 128], sizes = [8, 128], strides = [1, 1]} : vector<8x384xf32> to vector<8x128xf32>
    %304 = arith.addf %302, %303 : vector<8x128xf32>
    %305 = arith.negf %304 : vector<8x128xf32>
    %306 = math.exp %305 : vector<8x128xf32>
    %cst_71 = arith.constant 1.000000e+00 : f32
    %307 = vector.broadcast %cst_71 : f32 to vector<8x128xf32>
    %308 = arith.addf %307, %306 : vector<8x128xf32>
    %309 = arith.divf %307, %308 : vector<8x128xf32>
    %310 = vector.extract_strided_slice %290 {offsets = [0, 256], sizes = [8, 128], strides = [1, 1]} : vector<8x384xf32> to vector<8x128xf32>
    %311 = vector.extract_strided_slice %293 {offsets = [0, 256], sizes = [8, 128], strides = [1, 1]} : vector<8x384xf32> to vector<8x128xf32>
    %312 = arith.mulf %301, %311 : vector<8x128xf32>
    %313 = arith.addf %310, %312 : vector<8x128xf32>
    %314 = math.tanh %313 : vector<8x128xf32>
    %cst_72 = arith.constant 1.000000e+00 : f32
    %315 = vector.broadcast %cst_72 : f32 to vector<8x128xf32>
    %316 = arith.subf %315, %309 : vector<8x128xf32>
    %317 = arith.mulf %316, %314 : vector<8x128xf32>
    %318 = arith.mulf %309, %286 : vector<8x128xf32>
    %319 = arith.addf %317, %318 : vector<8x128xf32>
    %320 = vector.broadcast %c6_i32 : i32 to vector<8x1xi32>
    %321 = arith.cmpi sgt, %7, %320 : vector<8x1xi32>
    %cst_73 = arith.constant 0.000000e+00 : f32
    %322 = vector.shape_cast %321 : vector<8x1xi1> to vector<8x1xi1>
    %323 = vector.broadcast %322 : vector<8x1xi1> to vector<8x128xi1>
    %324 = vector.broadcast %cst_73 : f32 to vector<8x128xf32>
    %325 = arith.select %323, %319, %324 : vector<8x128xi1>, vector<8x128xf32>
    %326 = arith.index_cast %c6_i32 : i32 to index
    %c0_74 = arith.constant 0 : index
    %c0_75 = arith.constant 0 : index
    %327 = vector.load %arg7[%326, %c0_74, %c0_75] : memref<8x8x128xf32, #tpu.memory_space<vmem>>, vector<1x8x128xf32>
    %328 = vector.shape_cast %327 : vector<1x8x128xf32> to vector<8x128xf32>
    %329 = vector.shape_cast %325 : vector<8x128xf32> to vector<1x8x128xf32>
    tpu.vector_store %arg7[%326, %c0_74, %c0_75], %329 {strides = array<i32>} : memref<8x8x128xf32, #tpu.memory_space<vmem>>, vector<1x8x128xf32>,
    %330 = vector.shape_cast %321 : vector<8x1xi1> to vector<8x1xi1>
    %331 = vector.broadcast %330 : vector<8x1xi1> to vector<8x128xi1>
    %332 = arith.select %331, %319, %286 : vector<8x128xi1>, vector<8x128xf32>
    %c7_i32 = arith.constant 7 : i32
    %c8_i32_76 = arith.constant 8 : i32
    %333 = arith.muli %c7_i32, %c8_i32_76 : i32
    %334 = tpu.assume_multiple %333, 8 : i32
    %335 = arith.index_cast %334 : i32 to index
    %c0_77 = arith.constant 0 : index
    %336 = vector.load %arg9[%335, %c0_77] : memref<64x384xf32, #tpu.memory_space<vmem>>, vector<8x384xf32>
    %cst_78 = arith.constant dense<0.000000e+00> : vector<8x384xf32>
    %337 = tpu.matmul %332, %8, %cst_78 {dimension_numbers = #tpu.dot_dimension_numbers<[1], [0], [0], [1], [0, 0, 1, 1], [], []>} : vector<8x128xf32>, vector<128x384xf32>, vector<8x384xf32> -> vector<8x384xf32>
    %338 = vector.broadcast %9 : vector<1x384xf32> to vector<8x384xf32>
    %339 = arith.addf %337, %338 : vector<8x384xf32>
    %340 = vector.extract_strided_slice %336 {offsets = [0, 0], sizes = [8, 128], strides = [1, 1]} : vector<8x384xf32> to vector<8x128xf32>
    %341 = vector.extract_strided_slice %339 {offsets = [0, 0], sizes = [8, 128], strides = [1, 1]} : vector<8x384xf32> to vector<8x128xf32>
    %342 = arith.addf %340, %341 : vector<8x128xf32>
    %343 = arith.negf %342 : vector<8x128xf32>
    %344 = math.exp %343 : vector<8x128xf32>
    %cst_79 = arith.constant 1.000000e+00 : f32
    %345 = vector.broadcast %cst_79 : f32 to vector<8x128xf32>
    %346 = arith.addf %345, %344 : vector<8x128xf32>
    %347 = arith.divf %345, %346 : vector<8x128xf32>
    %348 = vector.extract_strided_slice %336 {offsets = [0, 128], sizes = [8, 128], strides = [1, 1]} : vector<8x384xf32> to vector<8x128xf32>
    %349 = vector.extract_strided_slice %339 {offsets = [0, 128], sizes = [8, 128], strides = [1, 1]} : vector<8x384xf32> to vector<8x128xf32>
    %350 = arith.addf %348, %349 : vector<8x128xf32>
    %351 = arith.negf %350 : vector<8x128xf32>
    %352 = math.exp %351 : vector<8x128xf32>
    %cst_80 = arith.constant 1.000000e+00 : f32
    %353 = vector.broadcast %cst_80 : f32 to vector<8x128xf32>
    %354 = arith.addf %353, %352 : vector<8x128xf32>
    %355 = arith.divf %353, %354 : vector<8x128xf32>
    %356 = vector.extract_strided_slice %336 {offsets = [0, 256], sizes = [8, 128], strides = [1, 1]} : vector<8x384xf32> to vector<8x128xf32>
    %357 = vector.extract_strided_slice %339 {offsets = [0, 256], sizes = [8, 128], strides = [1, 1]} : vector<8x384xf32> to vector<8x128xf32>
    %358 = arith.mulf %347, %357 : vector<8x128xf32>
    %359 = arith.addf %356, %358 : vector<8x128xf32>
    %360 = math.tanh %359 : vector<8x128xf32>
    %cst_81 = arith.constant 1.000000e+00 : f32
    %361 = vector.broadcast %cst_81 : f32 to vector<8x128xf32>
    %362 = arith.subf %361, %355 : vector<8x128xf32>
    %363 = arith.mulf %362, %360 : vector<8x128xf32>
    %364 = arith.mulf %355, %332 : vector<8x128xf32>
    %365 = arith.addf %363, %364 : vector<8x128xf32>
    %366 = vector.broadcast %c7_i32 : i32 to vector<8x1xi32>
    %367 = arith.cmpi sgt, %7, %366 : vector<8x1xi32>
    %cst_82 = arith.constant 0.000000e+00 : f32
    %368 = vector.shape_cast %367 : vector<8x1xi1> to vector<8x1xi1>
    %369 = vector.broadcast %368 : vector<8x1xi1> to vector<8x128xi1>
    %370 = vector.broadcast %cst_82 : f32 to vector<8x128xf32>
    %371 = arith.select %369, %365, %370 : vector<8x128xi1>, vector<8x128xf32>
    %372 = arith.index_cast %c7_i32 : i32 to index
    %c0_83 = arith.constant 0 : index
    %c0_84 = arith.constant 0 : index
    %373 = vector.load %arg7[%372, %c0_83, %c0_84] : memref<8x8x128xf32, #tpu.memory_space<vmem>>, vector<1x8x128xf32>
    %374 = vector.shape_cast %373 : vector<1x8x128xf32> to vector<8x128xf32>
    %375 = vector.shape_cast %371 : vector<8x128xf32> to vector<1x8x128xf32>
    tpu.vector_store %arg7[%372, %c0_83, %c0_84], %375 {strides = array<i32>} : memref<8x8x128xf32, #tpu.memory_space<vmem>>, vector<1x8x128xf32>,
    %376 = vector.shape_cast %367 : vector<8x1xi1> to vector<8x1xi1>
    %377 = vector.broadcast %376 : vector<8x1xi1> to vector<8x128xi1>
    %378 = arith.select %377, %365, %332 : vector<8x128xi1>, vector<8x128xf32>
    %c8_i32_85 = arith.constant 8 : i32
    %c0_86 = arith.constant 0 : index
    %c0_87 = arith.constant 0 : index
    %c0_88 = arith.constant 0 : index
    %379 = vector.load %arg8[%c0_86, %c0_87, %c0_88] : memref<1x8x128xf32, #tpu.memory_space<vmem>>, vector<1x8x128xf32>
    %380 = vector.shape_cast %379 : vector<1x8x128xf32> to vector<8x128xf32>
    %381 = vector.shape_cast %378 : vector<8x128xf32> to vector<1x8x128xf32>
    tpu.vector_store %arg8[%c0_86, %c0_87, %c0_88], %381 {strides = array<i32>} : memref<1x8x128xf32, #tpu.memory_space<vmem>>, vector<1x8x128xf32>,
    return
  }
  func.func @transform_0(%arg0: i32) -> (i32, i32) {
    %c0_i32 = arith.constant 0 : i32
    %c0_i32_0 = arith.constant 0 : i32
    %c0_i32_1 = arith.constant 0 : i32
    return %c0_i32, %c0_i32_0 : i32, i32
  }
  func.func @transform_1(%arg0: i32) -> (i32, i32) {
    %c0_i32 = arith.constant 0 : i32
    %c0_i32_0 = arith.constant 0 : i32
    %c0_i32_1 = arith.constant 0 : i32
    return %c0_i32, %c0_i32_0 : i32, i32
  }
  func.func @transform_2(%arg0: i32) -> (i32, i32) {
    %c0_i32 = arith.constant 0 : i32
    %c0_i32_0 = arith.constant 0 : i32
    %c0_i32_1 = arith.constant 0 : i32
    return %c0_i32, %c0_i32_0 : i32, i32
  }
  func.func @transform_3(%arg0: i32) -> (i32, i32) {
    %c0_i32 = arith.constant 0 : i32
    %c0_i32_0 = arith.constant 0 : i32
    %c0_i32_1 = arith.constant 0 : i32
    return %c0_i32, %c0_i32_0 : i32, i32
  }
  func.func @transform_4(%arg0: i32) -> (i32, i32) {
    %c0_i32 = arith.constant 0 : i32
    %c0_i32_0 = arith.constant 0 : i32
    %c0_i32_1 = arith.constant 0 : i32
    return %c0_i32, %c0_i32_0 : i32, i32
  }
  func.func @transform_5(%arg0: i32) -> (i32, i32) {
    %c0_i32 = arith.constant 0 : i32
    %c0_i32_0 = arith.constant 0 : i32
    %c0_i32_1 = arith.constant 0 : i32
    return %c0_i32, %c0_i32_0 : i32, i32
  }
  func.func @transform_6(%arg0: i32) -> (i32, i32, i32) {
    %c0_i32 = arith.constant 0 : i32
    %c0_i32_0 = arith.constant 0 : i32
    %c0_i32_1 = arith.constant 0 : i32
    %c0_i32_2 = arith.constant 0 : i32
    return %c0_i32, %c0_i32_0, %c0_i32_1 : i32, i32, i32
  }
  func.func @transform_7(%arg0: i32) -> (i32, i32, i32) {
    %c0_i32 = arith.constant 0 : i32
    %c0_i32_0 = arith.constant 0 : i32
    %c0_i32_1 = arith.constant 0 : i32
    %c0_i32_2 = arith.constant 0 : i32
    return %c0_i32, %c0_i32_0, %c0_i32_1 : i32, i32, i32
  }
}

</mosaic_0001>

<llo_original>
// kernel: tpu_custom_call.1
$region0: #{tpu_custom_call.1}
  #allocation0 [shape = 'u32[]', space=smem, size = 0x4, offset = 0x4, fixed_abs, tag = 'smem constant byte address 0x4 - core index']
  #allocation1 [shape = 'u32[72,128]{1,0:T(1,128)}', space=vmem, size = 0x9000, scoped, tag = 'internal scratch']
  #allocation2 [shape = 'f32[64,384]{1,0:T(8,128)}', space=vmem, size = 0x18000, scoped, tag = 'scratch operand']
  %s0 = inlined_call_operand.hbm [shape: f32[64,64], index: 0, kind: input, shape index: {}]
  %s1 = inlined_call_operand.vmem [shape: s32[8,1], index: 1, kind: input, shape index: {}]
  %s2 = inlined_call_operand.hbm [shape: f32[64,384], index: 2, kind: input, shape index: {}]
  %s3 = inlined_call_operand.hbm [shape: f32[128,384], index: 3, kind: input, shape index: {}]
  %s4 = inlined_call_operand.vmem [shape: f32[1,384], index: 4, kind: input, shape index: {}]
  %s5 = inlined_call_operand.vmem [shape: f32[1,384], index: 5, kind: input, shape index: {}]
  %s6 = inlined_call_operand.hbm [shape: f32[8,8,128], index: 6, kind: output, shape index: {0}]
  %s7 = inlined_call_operand.hbm [shape: f32[1,8,128], index: 7, kind: output, shape index: {1}]
  %8 = xla_tuple %s6, %s7
  %s9 = sld [smem:[#allocation0]]
  $region54: #{tpu_custom_call.1} parent=0
    _
  %s11 = ssub.s32 1, %s9
  %s12 = scalar_select 0, %s11, %s9
  $region1: #{tpu_custom_call.1} parent=0
    #allocation3 [shape = 'u8[32768]{0}', space=vmem, size = 0x8000, scoped, tag = 'input window, operand 0, single buffered']
    #allocation4 [shape = 's32[1]{0}', space=sflag, size = 0x4, scoped, tag = 'scoped memory for tpu_custom_call.1']
    #allocation5 [shape = 's32[1]{0}', space=sflag, size = 0x4, scoped, tag = 'scoped memory for tpu_custom_call.1']
    #allocation6 [shape = 'u8[98304]{0}', space=vmem, size = 0x18000, scoped, tag = 'input window, operand 2, single buffered']
    #allocation7 [shape = 's32[1]{0}', space=sflag, size = 0x4, scoped, tag = 'scoped memory for tpu_custom_call.1']
    #allocation8 [shape = 'u8[196608]{0}', space=vmem, size = 0x30000, scoped, tag = 'input window, operand 3, single buffered']
    #allocation9 [shape = 'u8[32768]{0}', space=vmem, size = 0x8000, scoped, tag = 'output window, operand 0, single buffered']
    #allocation10 [shape = 'u8[4096]{0}', space=vmem, size = 0x1000, scoped, tag = 'output window, operand 1, single buffered']
    #allocation11 [shape = 's32[1]{0}', space=sflag, size = 0x4, scoped, tag = 'scoped memory for tpu_custom_call.1']
    %13 = vsyncpa [#allocation4], 0
    %14 = vsyncpa [#allocation7], 0
    %15 = vsyncpa [#allocation5], 0
    %16 = vsyncpa [#allocation11], 0
    // Predicated region
    $region2: #{tpu_custom_call.1} parent=1 // pred_check
      _
    $region3: #{tpu_custom_call.1} parent=1 // pred_check_branch
      %18 = sbr.rel (0) target = $region5
    $region4: #{tpu_custom_call.1} parent=1 // pred_region
      %20 = vsyncadd [#allocation4], 0
      %s21 = sshll.u32 %s0, 4
      %s22 = int_to_ptr.hbm [resolvable:$true] %s21
      %s23 = sshll.u32 [#allocation3], 4
      %s24 = int_to_ptr.vmem [resolvable:$true] %s23
      %29 = dma.hbm_to_vmem [thread:$0]  %s22, 1024, %s24, [#allocation4], 128, 128, 8
    $region5: #{tpu_custom_call.1} parent=1 // pred_fallthru
      _
    // Predicated region
    $region6: #{tpu_custom_call.1} parent=1 // pred_check
      _
    $region7: #{tpu_custom_call.1} parent=1 // pred_check_branch
      %31 = sbr.rel (0) target = $region9
    $region8: #{tpu_custom_call.1} parent=1 // pred_region
      _
    $region9: #{tpu_custom_call.1} parent=1 // pred_fallthru
      _
    // Predicated region
    $region10: #{tpu_custom_call.1} parent=1 // pred_check
      _
    $region11: #{tpu_custom_call.1} parent=1 // pred_check_branch
      %33 = sbr.rel (0) target = $region13
    $region12: #{tpu_custom_call.1} parent=1 // pred_region
      %35 = vsyncadd [#allocation7], 0
      %s36 = sshll.u32 %s2, 4
      %s37 = int_to_ptr.hbm [resolvable:$true] %s36
      %s38 = sshll.u32 [#allocation6], 4
      %s39 = int_to_ptr.vmem [resolvable:$true] %s38
      %44 = dma.hbm_to_vmem [thread:$0]  %s37, 3072, %s39, [#allocation7], 384, 384, 24
    $region13: #{tpu_custom_call.1} parent=1 // pred_fallthru
      _
    // Predicated region
    $region14: #{tpu_custom_call.1} parent=1 // pred_check
      _
    $region15: #{tpu_custom_call.1} parent=1 // pred_check_branch
      %46 = sbr.rel (0) target = $region17
    $region16: #{tpu_custom_call.1} parent=1 // pred_region
      %48 = vsyncadd [#allocation7], 0
      %s49 = sshll.u32 %s3, 4
      %s50 = int_to_ptr.hbm [resolvable:$true] %s49
      %s51 = sshll.u32 [#allocation8], 4
      %s52 = int_to_ptr.vmem [resolvable:$true] %s51
      %57 = dma.hbm_to_vmem [thread:$0]  %s50, 6144, %s52, [#allocation7], 384, 384, 24
    $region17: #{tpu_custom_call.1} parent=1 // pred_fallthru
      _
    // Predicated region
    $region18: #{tpu_custom_call.1} parent=1 // pred_check
      _
    $region19: #{tpu_custom_call.1} parent=1 // pred_check_branch
      %59 = sbr.rel (0) target = $region21
    $region20: #{tpu_custom_call.1} parent=1 // pred_region
      _
    $region21: #{tpu_custom_call.1} parent=1 // pred_fallthru
      _
    // Predicated region
    $region22: #{tpu_custom_call.1} parent=1 // pred_check
      _
    $region23: #{tpu_custom_call.1} parent=1 // pred_check_branch
      %61 = sbr.rel (0) target = $region25
    $region24: #{tpu_custom_call.1} parent=1 // pred_region
      _
    $region25: #{tpu_custom_call.1} parent=1 // pred_fallthru
      _
    // Predicated region
    $region26: #{tpu_custom_call.1} parent=1 // pred_check
      _
    $region27: #{tpu_custom_call.1} parent=1 // pred_check_branch
      %63 = sbr.rel (0) target = $region29
    $region28: #{tpu_custom_call.1} parent=1 // pred_region
      %65 = dma.done [#allocation4], 1024
    $region29: #{tpu_custom_call.1} parent=1 // pred_fallthru
      _
    // Predicated region
    $region30: #{tpu_custom_call.1} parent=1 // pred_check
      _
    $region31: #{tpu_custom_call.1} parent=1 // pred_check_branch
      %67 = sbr.rel (0) target = $region33
    $region32: #{tpu_custom_call.1} parent=1 // pred_region
      %69 = dma.done [#allocation7], 3072
    $region33: #{tpu_custom_call.1} parent=1 // pred_fallthru
      _
    // Predicated region
    $region34: #{tpu_custom_call.1} parent=1 // pred_check
      _
    $region35: #{tpu_custom_call.1} parent=1 // pred_check_branch
      %71 = sbr.rel (0) target = $region37
    $region36: #{tpu_custom_call.1} parent=1 // pred_region
      %73 = dma.done [#allocation7], 6144
    $region37: #{tpu_custom_call.1} parent=1 // pred_fallthru
      _
    %v74 = vld [vmem:[#allocation3] sm:$0xff]
    %v75 = vld [vmem:[#allocation3 + $0x8] sm:$0xff]
    %v76 = vld [vmem:[#allocation3 + $0x10] sm:$0xff]
    %v77 = vld [vmem:[#allocation3 + $0x18] sm:$0xff]
    %v78 = vld [vmem:[#allocation3 + $0x20] sm:$0xff]
    %v79 = vld [vmem:[#allocation3 + $0x28] sm:$0xff]
    %v80 = vld [vmem:[#allocation3 + $0x30] sm:$0xff]
    %v81 = vld [vmem:[#allocation3 + $0x38] sm:$0xff]
    %v82 = vld [vmem:[#allocation6] sm:$0xff]
    %v83 = vld [vmem:[#allocation6 + $0x8] sm:$0xff]
    %v84 = vld [vmem:[#allocation6 + $0x10] sm:$0xff]
    %v85 = vld [vmem:[#allocation6 + $0x18] sm:$0xff]
    %v86 = vld [vmem:[#allocation6 + $0x20] sm:$0xff]
    %v87 = vld [vmem:[#allocation6 + $0x28] sm:$0xff]
    %v88 = vld [vmem:[#allocation6 + $0x30] sm:$0xff]
    %v89 = vld [vmem:[#allocation6 + $0x38] sm:$0xff]
    %v90 = vld [vmem:[#allocation6 + $0x40] sm:$0xff]
    %v91 = vld [vmem:[#allocation6 + $0x48] sm:$0xff]
    %v92 = vld [vmem:[#allocation6 + $0x50] sm:$0xff]
    %v93 = vld [vmem:[#allocation6 + $0x58] sm:$0xff]
    %v94 = vld [vmem:[#allocation6 + $0x60] sm:$0xff]
    %v95 = vld [vmem:[#allocation6 + $0x68] sm:$0xff]
    %v96 = vld [vmem:[#allocation6 + $0x70] sm:$0xff]
    %v97 = vld [vmem:[#allocation6 + $0x78] sm:$0xff]
    %v98 = vld [vmem:[#allocation6 + $0x80] sm:$0xff]
    %v99 = vld [vmem:[#allocation6 + $0x88] sm:$0xff]
    %v100 = vld [vmem:[#allocation6 + $0x90] sm:$0xff]
    %v101 = vld [vmem:[#allocation6 + $0x98] sm:$0xff]
    %v102 = vld [vmem:[#allocation6 + $0xa0] sm:$0xff]
    %v103 = vld [vmem:[#allocation6 + $0xa8] sm:$0xff]
    %v104 = vld [vmem:[#allocation6 + $0xb0] sm:$0xff]
    %v105 = vld [vmem:[#allocation6 + $0xb8] sm:$0xff]
    %v106 = vld [vmem:[%s4] sm:$0x7]
    %v108 = vperm.slane %v106, 0
    %v109 = vperm.slane %v106, 1
    %v110 = vperm.slane %v106, 2
    %vm114 = vcmask 523264
    %v116 = vsel %vm114, %v74, 0
    %v119 = vsel %vm114, %v75, 0
    %v122 = vsel %vm114, %v76, 0
    %v125 = vsel %vm114, %v77, 0
    %v128 = vsel %vm114, %v78, 0
    %v131 = vsel %vm114, %v79, 0
    %v134 = vsel %vm114, %v80, 0
    %v137 = vsel %vm114, %v81, 0
    %139 = vmatpush.msra.mxu0 0.0
    %140 = vmatpush.msra.mxu0 0.0
    %141 = vmatpush.msra.mxu0 0.0
    %142 = vmatpush.msra.mxu0 0.0
    %143 = vmatpush.msra.mxu0 0.0
    %144 = vmatpush.msra.mxu0 0.0
    %145 = vmatpush.msra.mxu0 0.0
    %146 = vmatpush.msra.mxu0 0.0
    %147 = vmatpush.msra.mxu0 %v103
    %148 = vmatpush.msra.mxu0 %v100
    %149 = vmatpush.msra.mxu0 %v97
    %150 = vmatpush.msra.mxu0 %v94
    %151 = vmatpush.msra.mxu0 %v91
    %152 = vmatpush.msra.mxu0 %v88
    %153 = vmatpush.msra.mxu0 %v85
    %154 = vmatpush.msra.mxu0 %v82
    %155 = vmatmul.f32.gmra.mxu0 %v116
    %v156 = vpop.f32.mrf.mxu0
    %v157 = vadd.f32 %v108, %v156
    %158 = vmatmul.f32.gmra.mxu0 %v119
    %v159 = vpop.f32.mrf.mxu0
    %v160 = vadd.f32 %v108, %v159
    %161 = vmatmul.f32.gmra.mxu0 %v122
    %v162 = vpop.f32.mrf.mxu0
    %v163 = vadd.f32 %v108, %v162
    %164 = vmatmul.f32.gmra.mxu0 %v125
    %v165 = vpop.f32.mrf.mxu0
    %v166 = vadd.f32 %v108, %v165
    %167 = vmatmul.f32.gmra.mxu0 %v128
    %v168 = vpop.f32.mrf.mxu0
    %v169 = vadd.f32 %v108, %v168
    %170 = vmatmul.f32.gmra.mxu0 %v131
    %v171 = vpop.f32.mrf.mxu0
    %v172 = vadd.f32 %v108, %v171
    %173 = vmatmul.f32.gmra.mxu0 %v134
    %v174 = vpop.f32.mrf.mxu0
    %v175 = vadd.f32 %v108, %v174
    %176 = vmatmul.f32.gmra.mxu0 %v137
    %v177 = vpop.f32.mrf.mxu0
    %v178 = vadd.f32 %v108, %v177
    %179 = vdwg.mxu0
    %180 = vmatpush.msra.mxu0 0.0
    %181 = vmatpush.msra.mxu0 0.0
    %182 = vmatpush.msra.mxu0 0.0
    %183 = vmatpush.msra.mxu0 0.0
    %184 = vmatpush.msra.mxu0 0.0
    %185 = vmatpush.msra.mxu0 0.0
    %186 = vmatpush.msra.mxu0 0.0
    %187 = vmatpush.msra.mxu0 0.0
    %188 = vmatpush.msra.mxu0 %v104
    %189 = vmatpush.msra.mxu0 %v101
    %190 = vmatpush.msra.mxu0 %v98
    %191 = vmatpush.msra.mxu0 %v95
    %192 = vmatpush.msra.mxu0 %v92
    %193 = vmatpush.msra.mxu0 %v89
    %194 = vmatpush.msra.mxu0 %v86
    %195 = vmatpush.msra.mxu0 %v83
    %196 = vmatmul.f32.gmra.mxu0 %v116
    %v197 = vpop.f32.mrf.mxu0
    %v198 = vadd.f32 %v109, %v197
    %199 = vmatmul.f32.gmra.mxu0 %v119
    %v200 = vpop.f32.mrf.mxu0
    %v201 = vadd.f32 %v109, %v200
    %202 = vmatmul.f32.gmra.mxu0 %v122
    %v203 = vpop.f32.mrf.mxu0
    %v204 = vadd.f32 %v109, %v203
    %205 = vmatmul.f32.gmra.mxu0 %v125
    %v206 = vpop.f32.mrf.mxu0
    %v207 = vadd.f32 %v109, %v206
    %208 = vmatmul.f32.gmra.mxu0 %v128
    %v209 = vpop.f32.mrf.mxu0
    %v210 = vadd.f32 %v109, %v209
    %211 = vmatmul.f32.gmra.mxu0 %v131
    %v212 = vpop.f32.mrf.mxu0
    %v213 = vadd.f32 %v109, %v212
    %214 = vmatmul.f32.gmra.mxu0 %v134
    %v215 = vpop.f32.mrf.mxu0
    %v216 = vadd.f32 %v109, %v215
    %217 = vmatmul.f32.gmra.mxu0 %v137
    %v218 = vpop.f32.mrf.mxu0
    %v219 = vadd.f32 %v109, %v218
    %220 = vdwg.mxu0
    %221 = vmatpush.msra.mxu0 0.0
    %222 = vmatpush.msra.mxu0 0.0
    %223 = vmatpush.msra.mxu0 0.0
    %224 = vmatpush.msra.mxu0 0.0
    %225 = vmatpush.msra.mxu0 0.0
    %226 = vmatpush.msra.mxu0 0.0
    %227 = vmatpush.msra.mxu0 0.0
    %228 = vmatpush.msra.mxu0 0.0
    %229 = vmatpush.msra.mxu0 %v105
    %230 = vmatpush.msra.mxu0 %v102
    %231 = vmatpush.msra.mxu0 %v99
    %232 = vmatpush.msra.mxu0 %v96
    %233 = vmatpush.msra.mxu0 %v93
    %234 = vmatpush.msra.mxu0 %v90
    %235 = vmatpush.msra.mxu0 %v87
    %236 = vmatpush.msra.mxu0 %v84
    %237 = vmatmul.f32.gmra.mxu0 %v116
    %v238 = vpop.f32.mrf.mxu0
    %v239 = vadd.f32 %v110, %v238
    %240 = vmatmul.f32.gmra.mxu0 %v119
    %v241 = vpop.f32.mrf.mxu0
    %v242 = vadd.f32 %v110, %v241
    %243 = vmatmul.f32.gmra.mxu0 %v122
    %v244 = vpop.f32.mrf.mxu0
    %v245 = vadd.f32 %v110, %v244
    %246 = vmatmul.f32.gmra.mxu0 %v125
    %v247 = vpop.f32.mrf.mxu0
    %v248 = vadd.f32 %v110, %v247
    %249 = vmatmul.f32.gmra.mxu0 %v128
    %v250 = vpop.f32.mrf.mxu0
    %v251 = vadd.f32 %v110, %v250
    %252 = vmatmul.f32.gmra.mxu0 %v131
    %v253 = vpop.f32.mrf.mxu0
    %v254 = vadd.f32 %v110, %v253
    %255 = vmatmul.f32.gmra.mxu0 %v134
    %v256 = vpop.f32.mrf.mxu0
    %v257 = vadd.f32 %v110, %v256
    %258 = vmatmul.f32.gmra.mxu0 %v137
    %v259 = vpop.f32.mrf.mxu0
    %v260 = vadd.f32 %v110, %v259
    %261 = vdwg.mxu0
    %262 = vst [vmem:[#allocation2] sm:$0xff] %v157
    %263 = vst [vmem:[#allocation2 + $0x8] sm:$0xff] %v198
    %264 = vst [vmem:[#allocation2 + $0x10] sm:$0xff] %v239
    %265 = vst [vmem:[#allocation2 + $0x18] sm:$0xff] %v160
    %266 = vst [vmem:[#allocation2 + $0x20] sm:$0xff] %v201
    %267 = vst [vmem:[#allocation2 + $0x28] sm:$0xff] %v242
    %268 = vst [vmem:[#allocation2 + $0x30] sm:$0xff] %v163
    %269 = vst [vmem:[#allocation2 + $0x38] sm:$0xff] %v204
    %270 = vst [vmem:[#allocation2 + $0x40] sm:$0xff] %v245
    %271 = vst [vmem:[#allocation2 + $0x48] sm:$0xff] %v166
    %272 = vst [vmem:[#allocation2 + $0x50] sm:$0xff] %v207
    %273 = vst [vmem:[#allocation2 + $0x58] sm:$0xff] %v248
    %274 = vst [vmem:[#allocation2 + $0x60] sm:$0xff] %v169
    %275 = vst [vmem:[#allocation2 + $0x68] sm:$0xff] %v210
    %276 = vst [vmem:[#allocation2 + $0x70] sm:$0xff] %v251
    %277 = vst [vmem:[#allocation2 + $0x78] sm:$0xff] %v172
    %278 = vst [vmem:[#allocation2 + $0x80] sm:$0xff] %v213
    %279 = vst [vmem:[#allocation2 + $0x88] sm:$0xff] %v254
    %280 = vst [vmem:[#allocation2 + $0x90] sm:$0xff] %v175
    %281 = vst [vmem:[#allocation2 + $0x98] sm:$0xff] %v216
    %282 = vst [vmem:[#allocation2 + $0xa0] sm:$0xff] %v257
    %283 = vst [vmem:[#allocation2 + $0xa8] sm:$0xff] %v178
    %284 = vst [vmem:[#allocation2 + $0xb0] sm:$0xff] %v219
    %285 = vst [vmem:[#allocation2 + $0xb8] sm:$0xff] %v260
    %v286 = vld [vmem:[%s1] sm:$0xff]
    %v287 = vld [vmem:[#allocation8] sm:$0xff]
    %v288 = vld [vmem:[#allocation8 + $0x8] sm:$0xff]
    %v289 = vld [vmem:[#allocation8 + $0x10] sm:$0xff]
    %v290 = vld [vmem:[#allocation8 + $0x18] sm:$0xff]
    %v291 = vld [vmem:[#allocation8 + $0x20] sm:$0xff]
    %v292 = vld [vmem:[#allocation8 + $0x28] sm:$0xff]
    %v293 = vld [vmem:[#allocation8 + $0x30] sm:$0xff]
    %v294 = vld [vmem:[#allocation8 + $0x38] sm:$0xff]
    %v295 = vld [vmem:[#allocation8 + $0x40] sm:$0xff]
    %v296 = vld [vmem:[#allocation8 + $0x48] sm:$0xff]
    %v297 = vld [vmem:[#allocation8 + $0x50] sm:$0xff]
    %v298 = vld [vmem:[#allocation8 + $0x58] sm:$0xff]
    %v299 = vld [vmem:[#allocation8 + $0x60] sm:$0xff]
    %v300 = vld [vmem:[#allocation8 + $0x68] sm:$0xff]
    %v301 = vld [vmem:[#allocation8 + $0x70] sm:$0xff]
    %v302 = vld [vmem:[#allocation8 + $0x78] sm:$0xff]
    %v303 = vld [vmem:[#allocation8 + $0x80] sm:$0xff]
    %v304 = vld [vmem:[#allocation8 + $0x88] sm:$0xff]
    %v305 = vld [vmem:[#allocation8 + $0x90] sm:$0xff]
    %v306 = vld [vmem:[#allocation8 + $0x98] sm:$0xff]
    %v307 = vld [vmem:[#allocation8 + $0xa0] sm:$0xff]
    %v308 = vld [vmem:[#allocation8 + $0xa8] sm:$0xff]
    %v309 = vld [vmem:[#allocation8 + $0xb0] sm:$0xff]
    %v310 = vld [vmem:[#allocation8 + $0xb8] sm:$0xff]
    %v311 = vld [vmem:[#allocation8 + $0xc0] sm:$0xff]
    %v312 = vld [vmem:[#allocation8 + $0xc8] sm:$0xff]
    %v313 = vld [vmem:[#allocation8 + $0xd0] sm:$0xff]
    %v314 = vld [vmem:[#allocation8 + $0xd8] sm:$0xff]
    %v315 = vld [vmem:[#allocation8 + $0xe0] sm:$0xff]
    %v316 = vld [vmem:[#allocation8 + $0xe8] sm:$0xff]
    %v317 = vld [vmem:[#allocation8 + $0xf0] sm:$0xff]
    %v318 = vld [vmem:[#allocation8 + $0xf8] sm:$0xff]
    %v319 = vld [vmem:[#allocation8 + $0x100] sm:$0xff]
    %v320 = vld [vmem:[#allocation8 + $0x108] sm:$0xff]
    %v321 = vld [vmem:[#allocation8 + $0x110] sm:$0xff]
    %v322 = vld [vmem:[#allocation8 + $0x118] sm:$0xff]
    %v323 = vld [vmem:[#allocation8 + $0x120] sm:$0xff]
    %v324 = vld [vmem:[#allocation8 + $0x128] sm:$0xff]
    %v325 = vld [vmem:[#allocation8 + $0x130] sm:$0xff]
    %v326 = vld [vmem:[#allocation8 + $0x138] sm:$0xff]
    %v327 = vld [vmem:[#allocation8 + $0x140] sm:$0xff]
    %v328 = vld [vmem:[#allocation8 + $0x148] sm:$0xff]
    %v329 = vld [vmem:[#allocation8 + $0x150] sm:$0xff]
    %v330 = vld [vmem:[#allocation8 + $0x158] sm:$0xff]
    %v331 = vld [vmem:[#allocation8 + $0x160] sm:$0xff]
    %v332 = vld [vmem:[#allocation8 + $0x168] sm:$0xff]
    %v333 = vld [vmem:[#allocation8 + $0x170] sm:$0xff]
    %v334 = vld [vmem:[#allocation8 + $0x178] sm:$0xff]
    %v335 = vld [vmem:[%s5] sm:$0x7]
    %s336 = smul.u32 0, 3
    %s337 = smul.addr %s336, 8
    %s338 = scalar_lea.vmem [#allocation2], %s337
    %v339 = vld [vmem:[%s338] sm:$0xff]
    %v340 = vld [vmem:[%s338 + $0x8] sm:$0xff]
    %v341 = vld [vmem:[%s338 + $0x10] sm:$0xff]
    %v343 = vperm.slane %v335, 0
    %v344 = vperm.slane %v335, 1
    %v345 = vperm.slane %v335, 2
    %349 = vmatpush.msra.mxu0 %v332
    %350 = vmatpush.msra.mxu0 %v329
    %351 = vmatpush.msra.mxu0 %v326
    %352 = vmatpush.msra.mxu0 %v323
    %353 = vmatpush.msra.mxu0 %v320
    %354 = vmatpush.msra.mxu0 %v317
    %355 = vmatpush.msra.mxu0 %v314
    %356 = vmatpush.msra.mxu0 %v311
    %357 = vmatpush.msra.mxu0 %v308
    %358 = vmatpush.msra.mxu0 %v305
    %359 = vmatpush.msra.mxu0 %v302
    %360 = vmatpush.msra.mxu0 %v299
    %361 = vmatpush.msra.mxu0 %v296
    %362 = vmatpush.msra.mxu0 %v293
    %363 = vmatpush.msra.mxu0 %v290
    %364 = vmatpush.msra.mxu0 %v287
    %365 = vmatmul.f32.gmra.mxu0 0.0
    %v366 = vpop.f32.mrf.mxu0
    %v367 = vadd.f32 %v343, %v366
    %368 = vdwg.mxu0
    %369 = vmatpush.msra.mxu0 %v333
    %370 = vmatpush.msra.mxu0 %v330
    %371 = vmatpush.msra.mxu0 %v327
    %372 = vmatpush.msra.mxu0 %v324
    %373 = vmatpush.msra.mxu0 %v321
    %374 = vmatpush.msra.mxu0 %v318
    %375 = vmatpush.msra.mxu0 %v315
    %376 = vmatpush.msra.mxu0 %v312
    %377 = vmatpush.msra.mxu0 %v309
    %378 = vmatpush.msra.mxu0 %v306
    %379 = vmatpush.msra.mxu0 %v303
    %380 = vmatpush.msra.mxu0 %v300
    %381 = vmatpush.msra.mxu0 %v297
    %382 = vmatpush.msra.mxu0 %v294
    %383 = vmatpush.msra.mxu0 %v291
    %384 = vmatpush.msra.mxu0 %v288
    %385 = vmatmul.f32.gmra.mxu0 0.0
    %v386 = vpop.f32.mrf.mxu0
    %v387 = vadd.f32 %v344, %v386
    %388 = vdwg.mxu0
    %389 = vmatpush.msra.mxu0 %v334
    %390 = vmatpush.msra.mxu0 %v331
    %391 = vmatpush.msra.mxu0 %v328
    %392 = vmatpush.msra.mxu0 %v325
    %393 = vmatpush.msra.mxu0 %v322
    %394 = vmatpush.msra.mxu0 %v319
    %395 = vmatpush.msra.mxu0 %v316
    %396 = vmatpush.msra.mxu0 %v313
    %397 = vmatpush.msra.mxu0 %v310
    %398 = vmatpush.msra.mxu0 %v307
    %399 = vmatpush.msra.mxu0 %v304
    %400 = vmatpush.msra.mxu0 %v301
    %401 = vmatpush.msra.mxu0 %v298
    %402 = vmatpush.msra.mxu0 %v295
    %403 = vmatpush.msra.mxu0 %v292
    %404 = vmatpush.msra.mxu0 %v289
    %405 = vmatmul.f32.gmra.mxu0 0.0
    %v406 = vpop.f32.mrf.mxu0
    %v407 = vadd.f32 %v345, %v406
    %408 = vdwg.mxu0
    %v409 = vadd.f32 %v339, %v367
    %v410 = vxor.u32 %v409, 2147483648
    %v411 = vmul.f32 %v410, 1.442695
    %v412 = vpow.pop %v411
    %v413 = vadd.f32 %v412, 1.0
    %v414 = vrcp.pop %v413
    %v415 = vmul.f32 %v413, %v414
    %v416 = vsub.f32 1.0, %v415
    %v417 = vmul.f32 %v414, %v416
    %v418 = vadd.f32 %v414, %v417
    %vm419 = vweird.f32 %v413
    %vm420 = vweird.f32 %v414
    %vm421 = vmor %vm419, %vm420
    %v422 = vsel %vm421, %v414, %v418
    %v423 = vand.u32 2147483647, %v413
    %vm424 = vcmp.eq.f32.partialorder %v423, 8.507059e+37
    %v425 = vand.u32 %v413, 2147483648
    %v426 = vor.u32 1.1754944e-38, %v425
    %v427 = vsel %vm424, %v426, %v422
    %v428 = vmul.f32 1.0, %v427
    %v429 = vadd.f32 %v340, %v387
    %v430 = vxor.u32 %v429, 2147483648
    %v431 = vmul.f32 %v430, 1.442695
    %v432 = vpow.pop %v431
    %v433 = vadd.f32 %v432, 1.0
    %v434 = vrcp.pop %v433
    %v435 = vmul.f32 %v433, %v434
    %v436 = vsub.f32 1.0, %v435
    %v437 = vmul.f32 %v434, %v436
    %v438 = vadd.f32 %v434, %v437
    %vm439 = vweird.f32 %v433
    %vm440 = vweird.f32 %v434
    %vm441 = vmor %vm439, %vm440
    %v442 = vsel %vm441, %v434, %v438
    %v443 = vand.u32 2147483647, %v433
    %vm444 = vcmp.eq.f32.partialorder %v443, 8.507059e+37
    %v445 = vand.u32 %v433, 2147483648
    %v446 = vor.u32 1.1754944e-38, %v445
    %v447 = vsel %vm444, %v446, %v442
    %v448 = vmul.f32 1.0, %v447
    %v449 = vmul.f32 %v428, %v407
    %v450 = vadd.f32 %v341, %v449
    %v451 = vtanh.pop %v450
    %v452 = vsub.f32 1.0, %v448
    %v453 = vmul.f32 %v452, %v451
    %v454 = vmul.f32 %v448, 0.0
    %v455 = vadd.f32 %v453, %v454
    %vm456 = vcmp.gt.s32.totalorder %v286, 0
    %v457 = vsel %vm456, 1, 0
    %458 = vset.pattern.permute.xlu0 0
    %459 = vperm.xlu0 %458, %v457
    %v460 = vpop.permute.xlu0 %459
    %vm461 = vcmp.eq.s32.totalorder %v460, 1
    %v462 = vsel %vm461, %v455, 0.0
    %463 = vst [vmem:[#allocation9] sm:$0xff] %v462
    %s464 = smul.u32 1, 3
    %s465 = smul.addr %s464, 8
    %s466 = scalar_lea.vmem [#allocation2], %s465
    %v467 = vld [vmem:[%s466] sm:$0xff]
    %v468 = vld [vmem:[%s466 + $0x8] sm:$0xff]
    %v469 = vld [vmem:[%s466 + $0x10] sm:$0xff]
    %470 = vmatpush.msra.mxu0 %v332
    %471 = vmatpush.msra.mxu0 %v329
    %472 = vmatpush.msra.mxu0 %v326
    %473 = vmatpush.msra.mxu0 %v323
    %474 = vmatpush.msra.mxu0 %v320
    %475 = vmatpush.msra.mxu0 %v317
    %476 = vmatpush.msra.mxu0 %v314
    %477 = vmatpush.msra.mxu0 %v311
    %478 = vmatpush.msra.mxu0 %v308
    %479 = vmatpush.msra.mxu0 %v305
    %480 = vmatpush.msra.mxu0 %v302
    %481 = vmatpush.msra.mxu0 %v299
    %482 = vmatpush.msra.mxu0 %v296
    %483 = vmatpush.msra.mxu0 %v293
    %484 = vmatpush.msra.mxu0 %v290
    %485 = vmatpush.msra.mxu0 %v287
    %486 = vmatmul.f32.gmra.mxu0 %v462
    %v487 = vpop.f32.mrf.mxu0
    %v488 = vadd.f32 %v343, %v487
    %489 = vdwg.mxu0
    %490 = vmatpush.msra.mxu0 %v333
    %491 = vmatpush.msra.mxu0 %v330
    %492 = vmatpush.msra.mxu0 %v327
    %493 = vmatpush.msra.mxu0 %v324
    %494 = vmatpush.msra.mxu0 %v321
    %495 = vmatpush.msra.mxu0 %v318
    %496 = vmatpush.msra.mxu0 %v315
    %497 = vmatpush.msra.mxu0 %v312
    %498 = vmatpush.msra.mxu0 %v309
    %499 = vmatpush.msra.mxu0 %v306
    %500 = vmatpush.msra.mxu0 %v303
    %501 = vmatpush.msra.mxu0 %v300
    %502 = vmatpush.msra.mxu0 %v297
    %503 = vmatpush.msra.mxu0 %v294
    %504 = vmatpush.msra.mxu0 %v291
    %505 = vmatpush.msra.mxu0 %v288
    %506 = vmatmul.f32.gmra.mxu0 %v462
    %v507 = vpop.f32.mrf.mxu0
    %v508 = vadd.f32 %v344, %v507
    %509 = vdwg.mxu0
    %510 = vmatpush.msra.mxu0 %v334
    %511 = vmatpush.msra.mxu0 %v331
    %512 = vmatpush.msra.mxu0 %v328
    %513 = vmatpush.msra.mxu0 %v325
    %514 = vmatpush.msra.mxu0 %v322
    %515 = vmatpush.msra.mxu0 %v319
    %516 = vmatpush.msra.mxu0 %v316
    %517 = vmatpush.msra.mxu0 %v313
    %518 = vmatpush.msra.mxu0 %v310
    %519 = vmatpush.msra.mxu0 %v307
    %520 = vmatpush.msra.mxu0 %v304
    %521 = vmatpush.msra.mxu0 %v301
    %522 = vmatpush.msra.mxu0 %v298
    %523 = vmatpush.msra.mxu0 %v295
    %524 = vmatpush.msra.mxu0 %v292
    %525 = vmatpush.msra.mxu0 %v289
    %526 = vmatmul.f32.gmra.mxu0 %v462
    %v527 = vpop.f32.mrf.mxu0
    %v528 = vadd.f32 %v345, %v527
    %529 = vdwg.mxu0
    %v530 = vadd.f32 %v467, %v488
    %v531 = vxor.u32 %v530, 2147483648
    %v532 = vmul.f32 %v531, 1.442695
    %v533 = vpow.pop %v532
    %v534 = vadd.f32 %v533, 1.0
    %v535 = vrcp.pop %v534
    %v536 = vmul.f32 %v534, %v535
    %v537 = vsub.f32 1.0, %v536
    %v538 = vmul.f32 %v535, %v537
    %v539 = vadd.f32 %v535, %v538
    %vm540 = vweird.f32 %v534
    %vm541 = vweird.f32 %v535
    %vm542 = vmor %vm540, %vm541
    %v543 = vsel %vm542, %v535, %v539
    %v544 = vand.u32 2147483647, %v534
    %vm545 = vcmp.eq.f32.partialorder %v544, 8.507059e+37
    %v546 = vand.u32 %v534, 2147483648
    %v547 = vor.u32 1.1754944e-38, %v546
    %v548 = vsel %vm545, %v547, %v543
    %v549 = vmul.f32 1.0, %v548
    %v550 = vadd.f32 %v468, %v508
    %v551 = vxor.u32 %v550, 2147483648
    %v552 = vmul.f32 %v551, 1.442695
    %v553 = vpow.pop %v552
    %v554 = vadd.f32 %v553, 1.0
    %v555 = vrcp.pop %v554
    %v556 = vmul.f32 %v554, %v555
    %v557 = vsub.f32 1.0, %v556
    %v558 = vmul.f32 %v555, %v557
    %v559 = vadd.f32 %v555, %v558
    %vm560 = vweird.f32 %v554
    %vm561 = vweird.f32 %v555
    %vm562 = vmor %vm560, %vm561
    %v563 = vsel %vm562, %v555, %v559
    %v564 = vand.u32 2147483647, %v554
    %vm565 = vcmp.eq.f32.partialorder %v564, 8.507059e+37
    %v566 = vand.u32 %v554, 2147483648
    %v567 = vor.u32 1.1754944e-38, %v566
    %v568 = vsel %vm565, %v567, %v563
    %v569 = vmul.f32 1.0, %v568
    %v570 = vmul.f32 %v549, %v528
    %v571 = vadd.f32 %v469, %v570
    %v572 = vtanh.pop %v571
    %v573 = vsub.f32 1.0, %v569
    %v574 = vmul.f32 %v573, %v572
    %v575 = vmul.f32 %v569, %v462
    %v576 = vadd.f32 %v574, %v575
    %vm577 = vcmp.gt.s32.totalorder %v286, 1
    %v578 = vsel %vm577, 1, 0
    %579 = vset.pattern.permute.xlu0 0
    %580 = vperm.xlu0 %579, %v578
    %v581 = vpop.permute.xlu0 %580
    %vm582 = vcmp.eq.s32.totalorder %v581, 1
    %v583 = vsel %vm582, %v576, 0.0
    %s584 = scalar_lea.vmem [#allocation9], 8
    %585 = vst [vmem:[%s584] sm:$0xff] %v583
    %v586 = vsel %vm582, %v576, %v462
    %s587 = smul.u32 2, 3
    %s588 = smul.addr %s587, 8
    %s589 = scalar_lea.vmem [#allocation2], %s588
    %v590 = vld [vmem:[%s589] sm:$0xff]
    %v591 = vld [vmem:[%s589 + $0x8] sm:$0xff]
    %v592 = vld [vmem:[%s589 + $0x10] sm:$0xff]
    %593 = vmatpush.msra.mxu0 %v332
    %594 = vmatpush.msra.mxu0 %v329
    %595 = vmatpush.msra.mxu0 %v326
    %596 = vmatpush.msra.mxu0 %v323
    %597 = vmatpush.msra.mxu0 %v320
    %598 = vmatpush.msra.mxu0 %v317
    %599 = vmatpush.msra.mxu0 %v314
    %600 = vmatpush.msra.mxu0 %v311
    %601 = vmatpush.msra.mxu0 %v308
    %602 = vmatpush.msra.mxu0 %v305
    %603 = vmatpush.msra.mxu0 %v302
    %604 = vmatpush.msra.mxu0 %v299
    %605 = vmatpush.msra.mxu0 %v296
    %606 = vmatpush.msra.mxu0 %v293
    %607 = vmatpush.msra.mxu0 %v290
    %608 = vmatpush.msra.mxu0 %v287
    %609 = vmatmul.f32.gmra.mxu0 %v586
    %v610 = vpop.f32.mrf.mxu0
    %v611 = vadd.f32 %v343, %v610
    %612 = vdwg.mxu0
    %613 = vmatpush.msra.mxu0 %v333
    %614 = vmatpush.msra.mxu0 %v330
    %615 = vmatpush.msra.mxu0 %v327
    %616 = vmatpush.msra.mxu0 %v324
    %617 = vmatpush.msra.mxu0 %v321
    %618 = vmatpush.msra.mxu0 %v318
    %619 = vmatpush.msra.mxu0 %v315
    %620 = vmatpush.msra.mxu0 %v312
    %621 = vmatpush.msra.mxu0 %v309
    %622 = vmatpush.msra.mxu0 %v306
    %623 = vmatpush.msra.mxu0 %v303
    %624 = vmatpush.msra.mxu0 %v300
    %625 = vmatpush.msra.mxu0 %v297
    %626 = vmatpush.msra.mxu0 %v294
    %627 = vmatpush.msra.mxu0 %v291
    %628 = vmatpush.msra.mxu0 %v288
    %629 = vmatmul.f32.gmra.mxu0 %v586
    %v630 = vpop.f32.mrf.mxu0
    %v631 = vadd.f32 %v344, %v630
    %632 = vdwg.mxu0
    %633 = vmatpush.msra.mxu0 %v334
    %634 = vmatpush.msra.mxu0 %v331
    %635 = vmatpush.msra.mxu0 %v328
    %636 = vmatpush.msra.mxu0 %v325
    %637 = vmatpush.msra.mxu0 %v322
    %638 = vmatpush.msra.mxu0 %v319
    %639 = vmatpush.msra.mxu0 %v316
    %640 = vmatpush.msra.mxu0 %v313
    %641 = vmatpush.msra.mxu0 %v310
    %642 = vmatpush.msra.mxu0 %v307
    %643 = vmatpush.msra.mxu0 %v304
    %644 = vmatpush.msra.mxu0 %v301
    %645 = vmatpush.msra.mxu0 %v298
    %646 = vmatpush.msra.mxu0 %v295
    %647 = vmatpush.msra.mxu0 %v292
    %648 = vmatpush.msra.mxu0 %v289
    %649 = vmatmul.f32.gmra.mxu0 %v586
    %v650 = vpop.f32.mrf.mxu0
    %v651 = vadd.f32 %v345, %v650
    %652 = vdwg.mxu0
    %v653 = vadd.f32 %v590, %v611
    %v654 = vxor.u32 %v653, 2147483648
    %v655 = vmul.f32 %v654, 1.442695
    %v656 = vpow.pop %v655
    %v657 = vadd.f32 %v656, 1.0
    %v658 = vrcp.pop %v657
    %v659 = vmul.f32 %v657, %v658
    %v660 = vsub.f32 1.0, %v659
    %v661 = vmul.f32 %v658, %v660
    %v662 = vadd.f32 %v658, %v661
    %vm663 = vweird.f32 %v657
    %vm664 = vweird.f32 %v658
    %vm665 = vmor %vm663, %vm664
    %v666 = vsel %vm665, %v658, %v662
    %v667 = vand.u32 2147483647, %v657
    %vm668 = vcmp.eq.f32.partialorder %v667, 8.507059e+37
    %v669 = vand.u32 %v657, 2147483648
    %v670 = vor.u32 1.1754944e-38, %v669
    %v671 = vsel %vm668, %v670, %v666
    %v672 = vmul.f32 1.0, %v671
    %v673 = vadd.f32 %v591, %v631
    %v674 = vxor.u32 %v673, 2147483648
    %v675 = vmul.f32 %v674, 1.442695
    %v676 = vpow.pop %v675
    %v677 = vadd.f32 %v676, 1.0
    %v678 = vrcp.pop %v677
    %v679 = vmul.f32 %v677, %v678
    %v680 = vsub.f32 1.0, %v679
    %v681 = vmul.f32 %v678, %v680
    %v682 = vadd.f32 %v678, %v681
    %vm683 = vweird.f32 %v677
    %vm684 = vweird.f32 %v678
    %vm685 = vmor %vm683, %vm684
    %v686 = vsel %vm685, %v678, %v682
    %v687 = vand.u32 2147483647, %v677
    %vm688 = vcmp.eq.f32.partialorder %v687, 8.507059e+37
    %v689 = vand.u32 %v677, 2147483648
    %v690 = vor.u32 1.1754944e-38, %v689
    %v691 = vsel %vm688, %v690, %v686
    %v692 = vmul.f32 1.0, %v691
    %v693 = vmul.f32 %v672, %v651
    %v694 = vadd.f32 %v592, %v693
    %v695 = vtanh.pop %v694
    %v696 = vsub.f32 1.0, %v692
    %v697 = vmul.f32 %v696, %v695
    %v698 = vmul.f32 %v692, %v586
    %v699 = vadd.f32 %v697, %v698
    %vm700 = vcmp.gt.s32.totalorder %v286, 2
    %v701 = vsel %vm700, 1, 0
    %702 = vset.pattern.permute.xlu0 0
    %703 = vperm.xlu0 %702, %v701
    %v704 = vpop.permute.xlu0 %703
    %vm705 = vcmp.eq.s32.totalorder %v704, 1
    %v706 = vsel %vm705, %v699, 0.0
    %s707 = scalar_lea.vmem [#allocation9], 16
    %708 = vst [vmem:[%s707] sm:$0xff] %v706
    %v709 = vsel %vm705, %v699, %v586
    %s710 = smul.u32 3, 3
    %s711 = smul.addr %s710, 8
    %s712 = scalar_lea.vmem [#allocation2], %s711
    %v713 = vld [vmem:[%s712] sm:$0xff]
    %v714 = vld [vmem:[%s712 + $0x8] sm:$0xff]
    %v715 = vld [vmem:[%s712 + $0x10] sm:$0xff]
    %716 = vmatpush.msra.mxu0 %v332
    %717 = vmatpush.msra.mxu0 %v329
    %718 = vmatpush.msra.mxu0 %v326
    %719 = vmatpush.msra.mxu0 %v323
    %720 = vmatpush.msra.mxu0 %v320
    %721 = vmatpush.msra.mxu0 %v317
    %722 = vmatpush.msra.mxu0 %v314
    %723 = vmatpush.msra.mxu0 %v311
    %724 = vmatpush.msra.mxu0 %v308
    %725 = vmatpush.msra.mxu0 %v305
    %726 = vmatpush.msra.mxu0 %v302
    %727 = vmatpush.msra.mxu0 %v299
    %728 = vmatpush.msra.mxu0 %v296
    %729 = vmatpush.msra.mxu0 %v293
    %730 = vmatpush.msra.mxu0 %v290
    %731 = vmatpush.msra.mxu0 %v287
    %732 = vmatmul.f32.gmra.mxu0 %v709
    %v733 = vpop.f32.mrf.mxu0
    %v734 = vadd.f32 %v343, %v733
    %735 = vdwg.mxu0
    %736 = vmatpush.msra.mxu0 %v333
    %737 = vmatpush.msra.mxu0 %v330
    %738 = vmatpush.msra.mxu0 %v327
    %739 = vmatpush.msra.mxu0 %v324
    %740 = vmatpush.msra.mxu0 %v321
    %741 = vmatpush.msra.mxu0 %v318
    %742 = vmatpush.msra.mxu0 %v315
    %743 = vmatpush.msra.mxu0 %v312
    %744 = vmatpush.msra.mxu0 %v309
    %745 = vmatpush.msra.mxu0 %v306
    %746 = vmatpush.msra.mxu0 %v303
    %747 = vmatpush.msra.mxu0 %v300
    %748 = vmatpush.msra.mxu0 %v297
    %749 = vmatpush.msra.mxu0 %v294
    %750 = vmatpush.msra.mxu0 %v291
    %751 = vmatpush.msra.mxu0 %v288
    %752 = vmatmul.f32.gmra.mxu0 %v709
    %v753 = vpop.f32.mrf.mxu0
    %v754 = vadd.f32 %v344, %v753
    %755 = vdwg.mxu0
    %756 = vmatpush.msra.mxu0 %v334
    %757 = vmatpush.msra.mxu0 %v331
    %758 = vmatpush.msra.mxu0 %v328
    %759 = vmatpush.msra.mxu0 %v325
    %760 = vmatpush.msra.mxu0 %v322
    %761 = vmatpush.msra.mxu0 %v319
    %762 = vmatpush.msra.mxu0 %v316
    %763 = vmatpush.msra.mxu0 %v313
    %764 = vmatpush.msra.mxu0 %v310
    %765 = vmatpush.msra.mxu0 %v307
    %766 = vmatpush.msra.mxu0 %v304
    %767 = vmatpush.msra.mxu0 %v301
    %768 = vmatpush.msra.mxu0 %v298
    %769 = vmatpush.msra.mxu0 %v295
    %770 = vmatpush.msra.mxu0 %v292
    %771 = vmatpush.msra.mxu0 %v289
    %772 = vmatmul.f32.gmra.mxu0 %v709
    %v773 = vpop.f32.mrf.mxu0
    %v774 = vadd.f32 %v345, %v773
    %775 = vdwg.mxu0
    %v776 = vadd.f32 %v713, %v734
    %v777 = vxor.u32 %v776, 2147483648
    %v778 = vmul.f32 %v777, 1.442695
    %v779 = vpow.pop %v778
    %v780 = vadd.f32 %v779, 1.0
    %v781 = vrcp.pop %v780
    %v782 = vmul.f32 %v780, %v781
    %v783 = vsub.f32 1.0, %v782
    %v784 = vmul.f32 %v781, %v783
    %v785 = vadd.f32 %v781, %v784
    %vm786 = vweird.f32 %v780
    %vm787 = vweird.f32 %v781
    %vm788 = vmor %vm786, %vm787
    %v789 = vsel %vm788, %v781, %v785
    %v790 = vand.u32 2147483647, %v780
    %vm791 = vcmp.eq.f32.partialorder %v790, 8.507059e+37
    %v792 = vand.u32 %v780, 2147483648
    %v793 = vor.u32 1.1754944e-38, %v792
    %v794 = vsel %vm791, %v793, %v789
    %v795 = vmul.f32 1.0, %v794
    %v796 = vadd.f32 %v714, %v754
    %v797 = vxor.u32 %v796, 2147483648
    %v798 = vmul.f32 %v797, 1.442695
    %v799 = vpow.pop %v798
    %v800 = vadd.f32 %v799, 1.0
    %v801 = vrcp.pop %v800
    %v802 = vmul.f32 %v800, %v801
    %v803 = vsub.f32 1.0, %v802
    %v804 = vmul.f32 %v801, %v803
    %v805 = vadd.f32 %v801, %v804
    %vm806 = vweird.f32 %v800
    %vm807 = vweird.f32 %v801
    %vm808 = vmor %vm806, %vm807
    %v809 = vsel %vm808, %v801, %v805
    %v810 = vand.u32 2147483647, %v800
    %vm811 = vcmp.eq.f32.partialorder %v810, 8.507059e+37
    %v812 = vand.u32 %v800, 2147483648
    %v813 = vor.u32 1.1754944e-38, %v812
    %v814 = vsel %vm811, %v813, %v809
    %v815 = vmul.f32 1.0, %v814
    %v816 = vmul.f32 %v795, %v774
    %v817 = vadd.f32 %v715, %v816
    %v818 = vtanh.pop %v817
    %v819 = vsub.f32 1.0, %v815
    %v820 = vmul.f32 %v819, %v818
    %v821 = vmul.f32 %v815, %v709
    %v822 = vadd.f32 %v820, %v821
    %vm823 = vcmp.gt.s32.totalorder %v286, 3
    %v824 = vsel %vm823, 1, 0
    %825 = vset.pattern.permute.xlu0 0
    %826 = vperm.xlu0 %825, %v824
    %v827 = vpop.permute.xlu0 %826
    %vm828 = vcmp.eq.s32.totalorder %v827, 1
    %v829 = vsel %vm828, %v822, 0.0
    %s830 = scalar_lea.vmem [#allocation9], 24
    %831 = vst [vmem:[%s830] sm:$0xff] %v829
    %v832 = vsel %vm828, %v822, %v709
    %s833 = smul.u32 4, 3
    %s834 = smul.addr %s833, 8
    %s835 = scalar_lea.vmem [#allocation2], %s834
    %v836 = vld [vmem:[%s835] sm:$0xff]
    %v837 = vld [vmem:[%s835 + $0x8] sm:$0xff]
    %v838 = vld [vmem:[%s835 + $0x10] sm:$0xff]
    %839 = vmatpush.msra.mxu0 %v332
    %840 = vmatpush.msra.mxu0 %v329
    %841 = vmatpush.msra.mxu0 %v326
    %842 = vmatpush.msra.mxu0 %v323
    %843 = vmatpush.msra.mxu0 %v320
    %844 = vmatpush.msra.mxu0 %v317
    %845 = vmatpush.msra.mxu0 %v314
    %846 = vmatpush.msra.mxu0 %v311
    %847 = vmatpush.msra.mxu0 %v308
    %848 = vmatpush.msra.mxu0 %v305
    %849 = vmatpush.msra.mxu0 %v302
    %850 = vmatpush.msra.mxu0 %v299
    %851 = vmatpush.msra.mxu0 %v296
    %852 = vmatpush.msra.mxu0 %v293
    %853 = vmatpush.msra.mxu0 %v290
    %854 = vmatpush.msra.mxu0 %v287
    %855 = vmatmul.f32.gmra.mxu0 %v832
    %v856 = vpop.f32.mrf.mxu0
    %v857 = vadd.f32 %v343, %v856
    %858 = vdwg.mxu0
    %859 = vmatpush.msra.mxu0 %v333
    %860 = vmatpush.msra.mxu0 %v330
    %861 = vmatpush.msra.mxu0 %v327
    %862 = vmatpush.msra.mxu0 %v324
    %863 = vmatpush.msra.mxu0 %v321
    %864 = vmatpush.msra.mxu0 %v318
    %865 = vmatpush.msra.mxu0 %v315
    %866 = vmatpush.msra.mxu0 %v312
    %867 = vmatpush.msra.mxu0 %v309
    %868 = vmatpush.msra.mxu0 %v306
    %869 = vmatpush.msra.mxu0 %v303
    %870 = vmatpush.msra.mxu0 %v300
    %871 = vmatpush.msra.mxu0 %v297
    %872 = vmatpush.msra.mxu0 %v294
    %873 = vmatpush.msra.mxu0 %v291
    %874 = vmatpush.msra.mxu0 %v288
    %875 = vmatmul.f32.gmra.mxu0 %v832
    %v876 = vpop.f32.mrf.mxu0
    %v877 = vadd.f32 %v344, %v876
    %878 = vdwg.mxu0
    %879 = vmatpush.msra.mxu0 %v334
    %880 = vmatpush.msra.mxu0 %v331
    %881 = vmatpush.msra.mxu0 %v328
    %882 = vmatpush.msra.mxu0 %v325
    %883 = vmatpush.msra.mxu0 %v322
    %884 = vmatpush.msra.mxu0 %v319
    %885 = vmatpush.msra.mxu0 %v316
    %886 = vmatpush.msra.mxu0 %v313
    %887 = vmatpush.msra.mxu0 %v310
    %888 = vmatpush.msra.mxu0 %v307
    %889 = vmatpush.msra.mxu0 %v304
    %890 = vmatpush.msra.mxu0 %v301
    %891 = vmatpush.msra.mxu0 %v298
    %892 = vmatpush.msra.mxu0 %v295
    %893 = vmatpush.msra.mxu0 %v292
    %894 = vmatpush.msra.mxu0 %v289
    %895 = vmatmul.f32.gmra.mxu0 %v832
    %v896 = vpop.f32.mrf.mxu0
    %v897 = vadd.f32 %v345, %v896
    %898 = vdwg.mxu0
    %v899 = vadd.f32 %v836, %v857
    %v900 = vxor.u32 %v899, 2147483648
    %v901 = vmul.f32 %v900, 1.442695
    %v902 = vpow.pop %v901
    %v903 = vadd.f32 %v902, 1.0
    %v904 = vrcp.pop %v903
    %v905 = vmul.f32 %v903, %v904
    %v906 = vsub.f32 1.0, %v905
    %v907 = vmul.f32 %v904, %v906
    %v908 = vadd.f32 %v904, %v907
    %vm909 = vweird.f32 %v903
    %vm910 = vweird.f32 %v904
    %vm911 = vmor %vm909, %vm910
    %v912 = vsel %vm911, %v904, %v908
    %v913 = vand.u32 2147483647, %v903
    %vm914 = vcmp.eq.f32.partialorder %v913, 8.507059e+37
    %v915 = vand.u32 %v903, 2147483648
    %v916 = vor.u32 1.1754944e-38, %v915
    %v917 = vsel %vm914, %v916, %v912
    %v918 = vmul.f32 1.0, %v917
    %v919 = vadd.f32 %v837, %v877
    %v920 = vxor.u32 %v919, 2147483648
    %v921 = vmul.f32 %v920, 1.442695
    %v922 = vpow.pop %v921
    %v923 = vadd.f32 %v922, 1.0
    %v924 = vrcp.pop %v923
    %v925 = vmul.f32 %v923, %v924
    %v926 = vsub.f32 1.0, %v925
    %v927 = vmul.f32 %v924, %v926
    %v928 = vadd.f32 %v924, %v927
    %vm929 = vweird.f32 %v923
    %vm930 = vweird.f32 %v924
    %vm931 = vmor %vm929, %vm930
    %v932 = vsel %vm931, %v924, %v928
    %v933 = vand.u32 2147483647, %v923
    %vm934 = vcmp.eq.f32.partialorder %v933, 8.507059e+37
    %v935 = vand.u32 %v923, 2147483648
    %v936 = vor.u32 1.1754944e-38, %v935
    %v937 = vsel %vm934, %v936, %v932
    %v938 = vmul.f32 1.0, %v937
    %v939 = vmul.f32 %v918, %v897
    %v940 = vadd.f32 %v838, %v939
    %v941 = vtanh.pop %v940
    %v942 = vsub.f32 1.0, %v938
    %v943 = vmul.f32 %v942, %v941
    %v944 = vmul.f32 %v938, %v832
    %v945 = vadd.f32 %v943, %v944
    %vm946 = vcmp.gt.s32.totalorder %v286, 4
    %v947 = vsel %vm946, 1, 0
    %948 = vset.pattern.permute.xlu0 0
    %949 = vperm.xlu0 %948, %v947
    %v950 = vpop.permute.xlu0 %949
    %vm951 = vcmp.eq.s32.totalorder %v950, 1
    %v952 = vsel %vm951, %v945, 0.0
    %s953 = scalar_lea.vmem [#allocation9], 32
    %954 = vst [vmem:[%s953] sm:$0xff] %v952
    %v955 = vsel %vm951, %v945, %v832
    %s956 = smul.u32 5, 3
    %s957 = smul.addr %s956, 8
    %s958 = scalar_lea.vmem [#allocation2], %s957
    %v959 = vld [vmem:[%s958] sm:$0xff]
    %v960 = vld [vmem:[%s958 + $0x8] sm:$0xff]
    %v961 = vld [vmem:[%s958 + $0x10] sm:$0xff]
    %962 = vmatpush.msra.mxu0 %v332
    %963 = vmatpush.msra.mxu0 %v329
    %964 = vmatpush.msra.mxu0 %v326
    %965 = vmatpush.msra.mxu0 %v323
    %966 = vmatpush.msra.mxu0 %v320
    %967 = vmatpush.msra.mxu0 %v317
    %968 = vmatpush.msra.mxu0 %v314
    %969 = vmatpush.msra.mxu0 %v311
    %970 = vmatpush.msra.mxu0 %v308
    %971 = vmatpush.msra.mxu0 %v305
    %972 = vmatpush.msra.mxu0 %v302
    %973 = vmatpush.msra.mxu0 %v299
    %974 = vmatpush.msra.mxu0 %v296
    %975 = vmatpush.msra.mxu0 %v293
    %976 = vmatpush.msra.mxu0 %v290
    %977 = vmatpush.msra.mxu0 %v287
    %978 = vmatmul.f32.gmra.mxu0 %v955
    %v979 = vpop.f32.mrf.mxu0
    %v980 = vadd.f32 %v343, %v979
    %981 = vdwg.mxu0
    %982 = vmatpush.msra.mxu0 %v333
    %983 = vmatpush.msra.mxu0 %v330
    %984 = vmatpush.msra.mxu0 %v327
    %985 = vmatpush.msra.mxu0 %v324
    %986 = vmatpush.msra.mxu0 %v321
    %987 = vmatpush.msra.mxu0 %v318
    %988 = vmatpush.msra.mxu0 %v315
    %989 = vmatpush.msra.mxu0 %v312
    %990 = vmatpush.msra.mxu0 %v309
    %991 = vmatpush.msra.mxu0 %v306
    %992 = vmatpush.msra.mxu0 %v303
    %993 = vmatpush.msra.mxu0 %v300
    %994 = vmatpush.msra.mxu0 %v297
    %995 = vmatpush.msra.mxu0 %v294
    %996 = vmatpush.msra.mxu0 %v291
    %997 = vmatpush.msra.mxu0 %v288
    %998 = vmatmul.f32.gmra.mxu0 %v955
    %v999 = vpop.f32.mrf.mxu0
    %v1000 = vadd.f32 %v344, %v999
    %1001 = vdwg.mxu0
    %1002 = vmatpush.msra.mxu0 %v334
    %1003 = vmatpush.msra.mxu0 %v331
    %1004 = vmatpush.msra.mxu0 %v328
    %1005 = vmatpush.msra.mxu0 %v325
    %1006 = vmatpush.msra.mxu0 %v322
    %1007 = vmatpush.msra.mxu0 %v319
    %1008 = vmatpush.msra.mxu0 %v316
    %1009 = vmatpush.msra.mxu0 %v313
    %1010 = vmatpush.msra.mxu0 %v310
    %1011 = vmatpush.msra.mxu0 %v307
    %1012 = vmatpush.msra.mxu0 %v304
    %1013 = vmatpush.msra.mxu0 %v301
    %1014 = vmatpush.msra.mxu0 %v298
    %1015 = vmatpush.msra.mxu0 %v295
    %1016 = vmatpush.msra.mxu0 %v292
    %1017 = vmatpush.msra.mxu0 %v289
    %1018 = vmatmul.f32.gmra.mxu0 %v955
    %v1019 = vpop.f32.mrf.mxu0
    %v1020 = vadd.f32 %v345, %v1019
    %1021 = vdwg.mxu0
    %v1022 = vadd.f32 %v959, %v980
    %v1023 = vxor.u32 %v1022, 2147483648
    %v1024 = vmul.f32 %v1023, 1.442695
    %v1025 = vpow.pop %v1024
    %v1026 = vadd.f32 %v1025, 1.0
    %v1027 = vrcp.pop %v1026
    %v1028 = vmul.f32 %v1026, %v1027
    %v1029 = vsub.f32 1.0, %v1028
    %v1030 = vmul.f32 %v1027, %v1029
    %v1031 = vadd.f32 %v1027, %v1030
    %vm1032 = vweird.f32 %v1026
    %vm1033 = vweird.f32 %v1027
    %vm1034 = vmor %vm1032, %vm1033
    %v1035 = vsel %vm1034, %v1027, %v1031
    %v1036 = vand.u32 2147483647, %v1026
    %vm1037 = vcmp.eq.f32.partialorder %v1036, 8.507059e+37
    %v1038 = vand.u32 %v1026, 2147483648
    %v1039 = vor.u32 1.1754944e-38, %v1038
    %v1040 = vsel %vm1037, %v1039, %v1035
    %v1041 = vmul.f32 1.0, %v1040
    %v1042 = vadd.f32 %v960, %v1000
    %v1043 = vxor.u32 %v1042, 2147483648
    %v1044 = vmul.f32 %v1043, 1.442695
    %v1045 = vpow.pop %v1044
    %v1046 = vadd.f32 %v1045, 1.0
    %v1047 = vrcp.pop %v1046
    %v1048 = vmul.f32 %v1046, %v1047
    %v1049 = vsub.f32 1.0, %v1048
    %v1050 = vmul.f32 %v1047, %v1049
    %v1051 = vadd.f32 %v1047, %v1050
    %vm1052 = vweird.f32 %v1046
    %vm1053 = vweird.f32 %v1047
    %vm1054 = vmor %vm1052, %vm1053
    %v1055 = vsel %vm1054, %v1047, %v1051
    %v1056 = vand.u32 2147483647, %v1046
    %vm1057 = vcmp.eq.f32.partialorder %v1056, 8.507059e+37
    %v1058 = vand.u32 %v1046, 2147483648
    %v1059 = vor.u32 1.1754944e-38, %v1058
    %v1060 = vsel %vm1057, %v1059, %v1055
    %v1061 = vmul.f32 1.0, %v1060
    %v1062 = vmul.f32 %v1041, %v1020
    %v1063 = vadd.f32 %v961, %v1062
    %v1064 = vtanh.pop %v1063
    %v1065 = vsub.f32 1.0, %v1061
    %v1066 = vmul.f32 %v1065, %v1064
    %v1067 = vmul.f32 %v1061, %v955
    %v1068 = vadd.f32 %v1066, %v1067
    %vm1069 = vcmp.gt.s32.totalorder %v286, 5
    %v1070 = vsel %vm1069, 1, 0
    %1071 = vset.pattern.permute.xlu0 0
    %1072 = vperm.xlu0 %1071, %v1070
    %v1073 = vpop.permute.xlu0 %1072
    %vm1074 = vcmp.eq.s32.totalorder %v1073, 1
    %v1075 = vsel %vm1074, %v1068, 0.0
    %s1076 = scalar_lea.vmem [#allocation9], 40
    %1077 = vst [vmem:[%s1076] sm:$0xff] %v1075
    %v1078 = vsel %vm1074, %v1068, %v955
    %s1079 = smul.u32 6, 3
    %s1080 = smul.addr %s1079, 8
    %s1081 = scalar_lea.vmem [#allocation2], %s1080
    %v1082 = vld [vmem:[%s1081] sm:$0xff]
    %v1083 = vld [vmem:[%s1081 + $0x8] sm:$0xff]
    %v1084 = vld [vmem:[%s1081 + $0x10] sm:$0xff]
    %1085 = vmatpush.msra.mxu0 %v332
    %1086 = vmatpush.msra.mxu0 %v329
    %1087 = vmatpush.msra.mxu0 %v326
    %1088 = vmatpush.msra.mxu0 %v323
    %1089 = vmatpush.msra.mxu0 %v320
    %1090 = vmatpush.msra.mxu0 %v317
    %1091 = vmatpush.msra.mxu0 %v314
    %1092 = vmatpush.msra.mxu0 %v311
    %1093 = vmatpush.msra.mxu0 %v308
    %1094 = vmatpush.msra.mxu0 %v305
    %1095 = vmatpush.msra.mxu0 %v302
    %1096 = vmatpush.msra.mxu0 %v299
    %1097 = vmatpush.msra.mxu0 %v296
    %1098 = vmatpush.msra.mxu0 %v293
    %1099 = vmatpush.msra.mxu0 %v290
    %1100 = vmatpush.msra.mxu0 %v287
    %1101 = vmatmul.f32.gmra.mxu0 %v1078
    %v1102 = vpop.f32.mrf.mxu0
    %v1103 = vadd.f32 %v343, %v1102
    %1104 = vdwg.mxu0
    %1105 = vmatpush.msra.mxu0 %v333
    %1106 = vmatpush.msra.mxu0 %v330
    %1107 = vmatpush.msra.mxu0 %v327
    %1108 = vmatpush.msra.mxu0 %v324
    %1109 = vmatpush.msra.mxu0 %v321
    %1110 = vmatpush.msra.mxu0 %v318
    %1111 = vmatpush.msra.mxu0 %v315
    %1112 = vmatpush.msra.mxu0 %v312
    %1113 = vmatpush.msra.mxu0 %v309
    %1114 = vmatpush.msra.mxu0 %v306
    %1115 = vmatpush.msra.mxu0 %v303
    %1116 = vmatpush.msra.mxu0 %v300
    %1117 = vmatpush.msra.mxu0 %v297
    %1118 = vmatpush.msra.mxu0 %v294
    %1119 = vmatpush.msra.mxu0 %v291
    %1120 = vmatpush.msra.mxu0 %v288
    %1121 = vmatmul.f32.gmra.mxu0 %v1078
    %v1122 = vpop.f32.mrf.mxu0
    %v1123 = vadd.f32 %v344, %v1122
    %1124 = vdwg.mxu0
    %1125 = vmatpush.msra.mxu0 %v334
    %1126 = vmatpush.msra.mxu0 %v331
    %1127 = vmatpush.msra.mxu0 %v328
    %1128 = vmatpush.msra.mxu0 %v325
    %1129 = vmatpush.msra.mxu0 %v322
    %1130 = vmatpush.msra.mxu0 %v319
    %1131 = vmatpush.msra.mxu0 %v316
    %1132 = vmatpush.msra.mxu0 %v313
    %1133 = vmatpush.msra.mxu0 %v310
    %1134 = vmatpush.msra.mxu0 %v307
    %1135 = vmatpush.msra.mxu0 %v304
    %1136 = vmatpush.msra.mxu0 %v301
    %1137 = vmatpush.msra.mxu0 %v298
    %1138 = vmatpush.msra.mxu0 %v295
    %1139 = vmatpush.msra.mxu0 %v292
    %1140 = vmatpush.msra.mxu0 %v289
    %1141 = vmatmul.f32.gmra.mxu0 %v1078
    %v1142 = vpop.f32.mrf.mxu0
    %v1143 = vadd.f32 %v345, %v1142
    %1144 = vdwg.mxu0
    %v1145 = vadd.f32 %v1082, %v1103
    %v1146 = vxor.u32 %v1145, 2147483648
    %v1147 = vmul.f32 %v1146, 1.442695
    %v1148 = vpow.pop %v1147
    %v1149 = vadd.f32 %v1148, 1.0
    %v1150 = vrcp.pop %v1149
    %v1151 = vmul.f32 %v1149, %v1150
    %v1152 = vsub.f32 1.0, %v1151
    %v1153 = vmul.f32 %v1150, %v1152
    %v1154 = vadd.f32 %v1150, %v1153
    %vm1155 = vweird.f32 %v1149
    %vm1156 = vweird.f32 %v1150
    %vm1157 = vmor %vm1155, %vm1156
    %v1158 = vsel %vm1157, %v1150, %v1154
    %v1159 = vand.u32 2147483647, %v1149
    %vm1160 = vcmp.eq.f32.partialorder %v1159, 8.507059e+37
    %v1161 = vand.u32 %v1149, 2147483648
    %v1162 = vor.u32 1.1754944e-38, %v1161
    %v1163 = vsel %vm1160, %v1162, %v1158
    %v1164 = vmul.f32 1.0, %v1163
    %v1165 = vadd.f32 %v1083, %v1123
    %v1166 = vxor.u32 %v1165, 2147483648
    %v1167 = vmul.f32 %v1166, 1.442695
    %v1168 = vpow.pop %v1167
    %v1169 = vadd.f32 %v1168, 1.0
    %v1170 = vrcp.pop %v1169
    %v1171 = vmul.f32 %v1169, %v1170
    %v1172 = vsub.f32 1.0, %v1171
    %v1173 = vmul.f32 %v1170, %v1172
    %v1174 = vadd.f32 %v1170, %v1173
    %vm1175 = vweird.f32 %v1169
    %vm1176 = vweird.f32 %v1170
    %vm1177 = vmor %vm1175, %vm1176
    %v1178 = vsel %vm1177, %v1170, %v1174
    %v1179 = vand.u32 2147483647, %v1169
    %vm1180 = vcmp.eq.f32.partialorder %v1179, 8.507059e+37
    %v1181 = vand.u32 %v1169, 2147483648
    %v1182 = vor.u32 1.1754944e-38, %v1181
    %v1183 = vsel %vm1180, %v1182, %v1178
    %v1184 = vmul.f32 1.0, %v1183
    %v1185 = vmul.f32 %v1164, %v1143
    %v1186 = vadd.f32 %v1084, %v1185
    %v1187 = vtanh.pop %v1186
    %v1188 = vsub.f32 1.0, %v1184
    %v1189 = vmul.f32 %v1188, %v1187
    %v1190 = vmul.f32 %v1184, %v1078
    %v1191 = vadd.f32 %v1189, %v1190
    %vm1192 = vcmp.gt.s32.totalorder %v286, 6
    %v1193 = vsel %vm1192, 1, 0
    %1194 = vset.pattern.permute.xlu0 0
    %1195 = vperm.xlu0 %1194, %v1193
    %v1196 = vpop.permute.xlu0 %1195
    %vm1197 = vcmp.eq.s32.totalorder %v1196, 1
    %v1198 = vsel %vm1197, %v1191, 0.0
    %s1199 = scalar_lea.vmem [#allocation9], 48
    %1200 = vst [vmem:[%s1199] sm:$0xff] %v1198
    %v1201 = vsel %vm1197, %v1191, %v1078
    %s1202 = smul.u32 7, 3
    %s1203 = smul.addr %s1202, 8
    %s1204 = scalar_lea.vmem [#allocation2], %s1203
    %v1205 = vld [vmem:[%s1204] sm:$0xff]
    %v1206 = vld [vmem:[%s1204 + $0x8] sm:$0xff]
    %v1207 = vld [vmem:[%s1204 + $0x10] sm:$0xff]
    %1208 = vmatpush.msra.mxu0 %v332
    %1209 = vmatpush.msra.mxu0 %v329
    %1210 = vmatpush.msra.mxu0 %v326
    %1211 = vmatpush.msra.mxu0 %v323
    %1212 = vmatpush.msra.mxu0 %v320
    %1213 = vmatpush.msra.mxu0 %v317
    %1214 = vmatpush.msra.mxu0 %v314
    %1215 = vmatpush.msra.mxu0 %v311
    %1216 = vmatpush.msra.mxu0 %v308
    %1217 = vmatpush.msra.mxu0 %v305
    %1218 = vmatpush.msra.mxu0 %v302
    %1219 = vmatpush.msra.mxu0 %v299
    %1220 = vmatpush.msra.mxu0 %v296
    %1221 = vmatpush.msra.mxu0 %v293
    %1222 = vmatpush.msra.mxu0 %v290
    %1223 = vmatpush.msra.mxu0 %v287
    %1224 = vmatmul.f32.gmra.mxu0 %v1201
    %v1225 = vpop.f32.mrf.mxu0
    %v1226 = vadd.f32 %v343, %v1225
    %1227 = vdwg.mxu0
    %1228 = vmatpush.msra.mxu0 %v333
    %1229 = vmatpush.msra.mxu0 %v330
    %1230 = vmatpush.msra.mxu0 %v327
    %1231 = vmatpush.msra.mxu0 %v324
    %1232 = vmatpush.msra.mxu0 %v321
    %1233 = vmatpush.msra.mxu0 %v318
    %1234 = vmatpush.msra.mxu0 %v315
    %1235 = vmatpush.msra.mxu0 %v312
    %1236 = vmatpush.msra.mxu0 %v309
    %1237 = vmatpush.msra.mxu0 %v306
    %1238 = vmatpush.msra.mxu0 %v303
    %1239 = vmatpush.msra.mxu0 %v300
    %1240 = vmatpush.msra.mxu0 %v297
    %1241 = vmatpush.msra.mxu0 %v294
    %1242 = vmatpush.msra.mxu0 %v291
    %1243 = vmatpush.msra.mxu0 %v288
    %1244 = vmatmul.f32.gmra.mxu0 %v1201
    %v1245 = vpop.f32.mrf.mxu0
    %v1246 = vadd.f32 %v344, %v1245
    %1247 = vdwg.mxu0
    %1248 = vmatpush.msra.mxu0 %v334
    %1249 = vmatpush.msra.mxu0 %v331
    %1250 = vmatpush.msra.mxu0 %v328
    %1251 = vmatpush.msra.mxu0 %v325
    %1252 = vmatpush.msra.mxu0 %v322
    %1253 = vmatpush.msra.mxu0 %v319
    %1254 = vmatpush.msra.mxu0 %v316
    %1255 = vmatpush.msra.mxu0 %v313
    %1256 = vmatpush.msra.mxu0 %v310
    %1257 = vmatpush.msra.mxu0 %v307
    %1258 = vmatpush.msra.mxu0 %v304
    %1259 = vmatpush.msra.mxu0 %v301
    %1260 = vmatpush.msra.mxu0 %v298
    %1261 = vmatpush.msra.mxu0 %v295
    %1262 = vmatpush.msra.mxu0 %v292
    %1263 = vmatpush.msra.mxu0 %v289
    %1264 = vmatmul.f32.gmra.mxu0 %v1201
    %v1265 = vpop.f32.mrf.mxu0
    %v1266 = vadd.f32 %v345, %v1265
    %1267 = vdwg.mxu0
    %v1268 = vadd.f32 %v1205, %v1226
    %v1269 = vxor.u32 %v1268, 2147483648
    %v1270 = vmul.f32 %v1269, 1.442695
    %v1271 = vpow.pop %v1270
    %v1272 = vadd.f32 %v1271, 1.0
    %v1273 = vrcp.pop %v1272
    %v1274 = vmul.f32 %v1272, %v1273
    %v1275 = vsub.f32 1.0, %v1274
    %v1276 = vmul.f32 %v1273, %v1275
    %v1277 = vadd.f32 %v1273, %v1276
    %vm1278 = vweird.f32 %v1272
    %vm1279 = vweird.f32 %v1273
    %vm1280 = vmor %vm1278, %vm1279
    %v1281 = vsel %vm1280, %v1273, %v1277
    %v1282 = vand.u32 2147483647, %v1272
    %vm1283 = vcmp.eq.f32.partialorder %v1282, 8.507059e+37
    %v1284 = vand.u32 %v1272, 2147483648
    %v1285 = vor.u32 1.1754944e-38, %v1284
    %v1286 = vsel %vm1283, %v1285, %v1281
    %v1287 = vmul.f32 1.0, %v1286
    %v1288 = vadd.f32 %v1206, %v1246
    %v1289 = vxor.u32 %v1288, 2147483648
    %v1290 = vmul.f32 %v1289, 1.442695
    %v1291 = vpow.pop %v1290
    %v1292 = vadd.f32 %v1291, 1.0
    %v1293 = vrcp.pop %v1292
    %v1294 = vmul.f32 %v1292, %v1293
    %v1295 = vsub.f32 1.0, %v1294
    %v1296 = vmul.f32 %v1293, %v1295
    %v1297 = vadd.f32 %v1293, %v1296
    %vm1298 = vweird.f32 %v1292
    %vm1299 = vweird.f32 %v1293
    %vm1300 = vmor %vm1298, %vm1299
    %v1301 = vsel %vm1300, %v1293, %v1297
    %v1302 = vand.u32 2147483647, %v1292
    %vm1303 = vcmp.eq.f32.partialorder %v1302, 8.507059e+37
    %v1304 = vand.u32 %v1292, 2147483648
    %v1305 = vor.u32 1.1754944e-38, %v1304
    %v1306 = vsel %vm1303, %v1305, %v1301
    %v1307 = vmul.f32 1.0, %v1306
    %v1308 = vmul.f32 %v1287, %v1266
    %v1309 = vadd.f32 %v1207, %v1308
    %v1310 = vtanh.pop %v1309
    %v1311 = vsub.f32 1.0, %v1307
    %v1312 = vmul.f32 %v1311, %v1310
    %v1313 = vmul.f32 %v1307, %v1201
    %v1314 = vadd.f32 %v1312, %v1313
    %vm1315 = vcmp.gt.s32.totalorder %v286, 7
    %v1316 = vsel %vm1315, 1, 0
    %1317 = vset.pattern.permute.xlu0 0
    %1318 = vperm.xlu0 %1317, %v1316
    %v1319 = vpop.permute.xlu0 %1318
    %vm1320 = vcmp.eq.s32.totalorder %v1319, 1
    %v1321 = vsel %vm1320, %v1314, 0.0
    %s1322 = scalar_lea.vmem [#allocation9], 56
    %1323 = vst [vmem:[%s1322] sm:$0xff] %v1321
    %v1324 = vsel %vm1320, %v1314, %v1201
    %1325 = vst [vmem:[#allocation10] sm:$0xff] %v1324
    // Predicated region
    $region38: #{tpu_custom_call.1} parent=1 // pred_check
      _
    $region39: #{tpu_custom_call.1} parent=1 // pred_check_branch
      %1327 = sbr.rel (0) target = $region41
    $region40: #{tpu_custom_call.1} parent=1 // pred_region
      %1329 = vsyncadd [#allocation5], 0
      %s1330 = sshll.u32 [#allocation9], 4
      %s1331 = int_to_ptr.vmem [resolvable:$true] %s1330
      %s1332 = sshll.u32 %s6, 4
      %s1333 = int_to_ptr.hbm [resolvable:$true] %s1332
      %1338 = dma.vmem_to_hbm [thread:$0]  %s1331, 1024, %s1333, [#allocation5], 128, 128, 8
    $region41: #{tpu_custom_call.1} parent=1 // pred_fallthru
      _
    // Predicated region
    $region42: #{tpu_custom_call.1} parent=1 // pred_check
      _
    $region43: #{tpu_custom_call.1} parent=1 // pred_check_branch
      %1340 = sbr.rel (0) target = $region45
    $region44: #{tpu_custom_call.1} parent=1 // pred_region
      %1342 = vsyncadd [#allocation11], 0
      %s1344 = sshll.u32 [#allocation10], 4
      %s1345 = int_to_ptr.vmem [resolvable:$true] %s1344
      %s1346 = sshll.u32 %s7, 4
      %s1347 = int_to_ptr.hbm [resolvable:$true] %s1346
      %1349 = dma.vmem_to_hbm [thread:$0]  %s1345, 128, %s1347, [#allocation11]
    $region45: #{tpu_custom_call.1} parent=1 // pred_fallthru
      _
    // Predicated region
    $region46: #{tpu_custom_call.1} parent=1 // pred_check
      _
    $region47: #{tpu_custom_call.1} parent=1 // pred_check_branch
      %1351 = sbr.rel (0) target = $region49
    $region48: #{tpu_custom_call.1} parent=1 // pred_region
      %1353 = dma.done [#allocation5], 1024
    $region49: #{tpu_custom_call.1} parent=1 // pred_fallthru
      _
    // Predicated region
    $region50: #{tpu_custom_call.1} parent=1 // pred_check
      _
    $region51: #{tpu_custom_call.1} parent=1 // pred_check_branch
      %1355 = sbr.rel (0) target = $region53
    $region52: #{tpu_custom_call.1} parent=1 // pred_region
      %1357 = dma.done [#allocation11], 128
    $region53: #{tpu_custom_call.1} parent=1 // pred_fallthru
      _
    %1358 = vsyncpa [#allocation4], 1
    %1359 = vsyncpa [#allocation7], 1
    %1360 = vsyncpa [#allocation5], 1
    %1361 = vsyncpa [#allocation11], 1

</llo_original>
